<compile_context>
chip_gen: v5e
topology: v5e:2x2
jax: 0.10.0
libtpu: 0.0.40
codegen_flags: <defaults>
</compile_context>

<pallas_src>
import functools

import jax
import jax.numpy as jnp
from jax.experimental import pallas as pl
from jax.experimental.pallas import tpu as pltpu


# --------------------------------------------------------------------------- #
# Fast path: the whole (C, N) slab of one batch element fits in VMEM.         #
# --------------------------------------------------------------------------- #
def _linear_attention_kernel_full(x_ref, wqkv_ref, wout_ref, bout_ref,
                                  gamma_ref, beta_ref, ctx_scale_ref, o_ref,
                                  *, heads, dim_head, exp_dtype):
    """One batch element per grid step, channel-major (C, N) layout.

    x_ref:         (1, C, N)        activation (original dtype, cast in-kernel)
    wqkv_ref:      (3*hidden, C)    to_qkv weight, PyTorch layout, mm dtype
    wout_ref:      (C, hidden)      to_out[0] weight, PyTorch layout, mm dtype
    bout_ref:      (C, 1)           to_out[0] bias, f32
    gamma_ref:     (C, 1)           GroupNorm(1, dim) weight, f32
    beta_ref:      (C, 1)           GroupNorm(1, dim) bias, f32
    ctx_scale_ref: (hidden, hidden) head block-diag mask * scale / (H*W), f32
    o_ref:         (1, C, N)
    """
    hidden = heads * dim_head
    mm = wqkv_ref.dtype
    x = x_ref[0].astype(mm)                       # in-kernel cast (no HBM pass)
    n = x.shape[-1]

    # --- to_qkv: 1x1 conv == Wqkv @ x --------------------------------------
    qkv = jnp.dot(wqkv_ref[...], x, preferred_element_type=jnp.float32)
    q = qkv[0:hidden]                             # (hidden, N)
    k = qkv[hidden:2 * hidden]                    # (hidden, N)
    v = qkv[2 * hidden:3 * hidden]                # (hidden, N)

    # --- q softmax over dim_head within each head (sublane groups) ---------
    q3 = q.reshape(heads, dim_head, n)
    qm = jnp.max(q3, axis=1, keepdims=True)
    qe = jnp.exp((q3 - qm).astype(exp_dtype)).astype(jnp.float32)
    qs = qe * pl.reciprocal(jnp.sum(qe, axis=1, keepdims=True), approx=True)
    qs = qs.reshape(hidden, n)

    # --- k softmax over N: keep exp UNnormalised; fold the denominator into
    # the (hidden, hidden) context row scale (saves a hidden x N VALU pass). --
    km = jnp.max(k, axis=-1, keepdims=True)
    ke = jnp.exp((k - km).astype(exp_dtype)).astype(jnp.float32)
    kden = jnp.sum(ke, axis=-1, keepdims=True)                     # (hidden, 1)

    # ctx[d, e] = sum_n ke[d, n] * v[e, n]  (row d carries the k-softmax index)
    ctx = jax.lax.dot_general(
        ke.astype(mm), v.astype(mm),
        dimension_numbers=(((1,), (1,)), ((), ())),
        preferred_element_type=jnp.float32)                        # (hidden, hidden)
    # head block-diag mask * q-scale * 1/(H*W) * 1/kden — one tiny fused pass.
    ctx = ctx * ctx_scale_ref[...] * pl.reciprocal(kden, approx=True)

    # attn[e, n] = sum_d ctx[d, e] * qs[d, n]
    attn = jax.lax.dot_general(
        ctx.astype(mm), qs.astype(mm),
        dimension_numbers=(((0,), (0,)), ((), ())),
        preferred_element_type=jnp.float32)                        # (hidden, N)

    # --- to_out: 1x1 conv (bias) + GroupNorm(1, dim), single-pass stats -----
    y = jnp.dot(wout_ref[...], attn.astype(mm),
                preferred_element_type=jnp.float32) + bout_ref[...]   # (C, N)
    inv_cnt = 1.0 / float(y.shape[0] * y.shape[1])
    mean = jnp.sum(y, keepdims=True) * inv_cnt                     # (1, 1)
    var = jnp.sum(y * y, keepdims=True) * inv_cnt - mean * mean
    rstd = jax.lax.rsqrt(var + 1e-5)
    o_ref[0] = ((y - mean) * rstd * gamma_ref[...]
                + beta_ref[...]).astype(o_ref.dtype)


# --------------------------------------------------------------------------- #
# Streaming path: spatial extent tiled (needed on v7x / large feature maps).  #
# --------------------------------------------------------------------------- #
def _linear_attention_kernel_tiled(x_ref, wqkv_ref, wout_ref, bout_ref,
                                   gamma_ref, beta_ref, ctx_scale_ref, o_ref,
                                   m_sc, l_sc, ctx_sc, s1_sc, s2_sc,
                                   *, heads, dim_head, n_total, exp_dtype):
    """grid = (B, 3 phases, N // TN).

    Phase 0: online (running max / running sum) k-softmax; accumulates the
             (hidden, hidden) context in VMEM scratch, finalised on the last
             tile (mask * scale/(H*W) * 1/denominator folded in).
    Phase 1: recompute q-projection per tile, attn, to_out; accumulate
             GroupNorm sum and sum-of-squares.
    Phase 2: recompute y per tile, normalise with the accumulated statistics,
             store.  Only phase 2 writes the output block.
    """
    p = pl.program_id(1)
    t = pl.program_id(2)
    nt = pl.num_programs(2)
    hidden = heads * dim_head
    mm = wqkv_ref.dtype
    x = x_ref[0].astype(mm)                                         # (C, TN)
    tn = x.shape[-1]

    @pl.when(jnp.logical_and(p == 0, t == 0))
    def _init():
        m_sc[...] = jnp.full(m_sc.shape, -jnp.inf, m_sc.dtype)
        l_sc[...] = jnp.zeros(l_sc.shape, l_sc.dtype)
        ctx_sc[...] = jnp.zeros(ctx_sc.shape, ctx_sc.dtype)
        s1_sc[...] = jnp.zeros(s1_sc.shape, s1_sc.dtype)
        s2_sc[...] = jnp.zeros(s2_sc.shape, s2_sc.dtype)

    @pl.when(p == 0)
    def _phase_context():
        kv = jnp.dot(wqkv_ref[hidden:, :], x,
                     preferred_element_type=jnp.float32)            # (2h, TN)
        k = kv[0:hidden]
        v = kv[hidden:2 * hidden]
        m_new = jnp.maximum(m_sc[...], jnp.max(k, axis=-1, keepdims=True))
        alpha = jnp.exp(m_sc[...] - m_new)                          # (hidden, 1)
        ke = jnp.exp((k - m_new).astype(exp_dtype)).astype(jnp.float32)
        l_sc[...] = alpha * l_sc[...] + jnp.sum(ke, axis=-1, keepdims=True)
        ctx_sc[...] = alpha * ctx_sc[...] + jax.lax.dot_general(
            ke.astype(mm), v.astype(mm),
            dimension_numbers=(((1,), (1,)), ((), ())),
            preferred_element_type=jnp.float32)                     # (d, e)
        m_sc[...] = m_new

        @pl.when(t == nt - 1)
        def _finalize():
            ctx_sc[...] = (ctx_sc[...] * ctx_scale_ref[...]
                           * pl.reciprocal(l_sc[...], approx=True))

    @pl.when(p > 0)
    def _phase_out():
        q = jnp.dot(wqkv_ref[0:hidden, :], x,
                    preferred_element_type=jnp.float32)             # (hidden, TN)
        q3 = q.reshape(heads, dim_head, tn)
        qm = jnp.max(q3, axis=1, keepdims=True)
        qe = jnp.exp((q3 - qm).astype(exp_dtype)).astype(jnp.float32)
        qs = (qe * pl.reciprocal(jnp.sum(qe, axis=1, keepdims=True), approx=True)
              ).reshape(hidden, tn)
        attn = jax.lax.dot_general(
            ctx_sc[...].astype(mm), qs.astype(mm),
            dimension_numbers=(((0,), (0,)), ((), ())),
            preferred_element_type=jnp.float32)                     # (hidden, TN)
        y = jnp.dot(wout_ref[...], attn.astype(mm),
                    preferred_element_type=jnp.float32) + bout_ref[...]  # (C, TN)

        @pl.when(p == 1)
        def _accumulate_stats():
            s1_sc[...] += jnp.sum(y, keepdims=True)
            s2_sc[...] += jnp.sum(y * y, keepdims=True)

        @pl.when(p == 2)
        def _normalize_and_store():
            inv_cnt = 1.0 / float(y.shape[0] * n_total)
            mean = s1_sc[...] * inv_cnt                             # (1, 1)
            var = s2_sc[...] * inv_cnt - mean * mean
            rstd = jax.lax.rsqrt(var + 1e-5)
            o_ref[0] = ((y - mean) * rstd * gamma_ref[...]
                        + beta_ref[...]).astype(o_ref.dtype)


# --------------------------------------------------------------------------- #
# Wrapper.                                                                     #
# --------------------------------------------------------------------------- #
def linear_attention(x_nchw, wqkv, wout, bout, gamma, beta, *, heads, dim_head,
                     matmul_dtype=None, exp_dtype=None, out_dtype=None,
                     spatial_block=None, interpret=False):
    """x_nchw: (B, C, H, W); parameters in PyTorch Conv2d layout.

    matmul_dtype: MXU operand dtype (pass jnp.bfloat16 on v6e/v7x; f32 accum kept).
    exp_dtype:    dtype for the softmax exponentials (pass jnp.bfloat16 on
                  v6e/v7x to use the bf16 EUP; defaults to f32 — v5e has no
                  bf16 EUP).
    out_dtype:    output dtype; default bf16 when matmul_dtype is bf16, else
                  x.dtype (halves HBM write traffic for bf16 nets).
    spatial_block: force a spatial tile size (multiple of 128 dividing H*W) to
                  use the streaming N-tiled path; auto-selected when the whole
                  (C, H*W) slab would not fit the VMEM budget.
    """
    B, C, Himg, Wimg = x_nchw.shape
    N = Himg * Wimg
    hidden = heads * dim_head
    scale = dim_head ** (-0.5)

    mm_dtype = (jnp.dtype(matmul_dtype) if matmul_dtype is not None
                else jnp.dtype(x_nchw.dtype))
    if out_dtype is None:
        out_dtype = (jnp.dtype(jnp.bfloat16) if mm_dtype == jnp.dtype(jnp.bfloat16)
                     else jnp.dtype(x_nchw.dtype))
    else:
        out_dtype = jnp.dtype(out_dtype)
    exp_dt = jnp.dtype(exp_dtype) if exp_dtype is not None else jnp.dtype(jnp.float32)

    # Channel-major view: pure reshape, no transpose.  The activation keeps its
    # own dtype; the mm-dtype cast happens inside the kernel.
    x = x_nchw.reshape(B, C, N)

    # Parameters are tiny: reshape/cast them in the wrapper.
    wqkv2 = jnp.asarray(wqkv).reshape(3 * hidden, C).astype(mm_dtype)
    wout2 = jnp.asarray(wout).reshape(C, hidden).astype(mm_dtype)
    bout2 = jnp.asarray(bout).reshape(C, 1).astype(jnp.float32)
    gamma2 = jnp.asarray(gamma).reshape(C, 1).astype(jnp.float32)
    beta2 = jnp.asarray(beta).reshape(C, 1).astype(jnp.float32)

    # Head block-diagonal mask with the q-scale and 1/(H*W) folded in.
    head_id = jnp.arange(hidden, dtype=jnp.int32) // dim_head
    ctx_scale = ((head_id[:, None] == head_id[None, :])
                 .astype(jnp.float32) * (scale / float(N)))         # (hidden, hidden)

    # ---------------- VMEM budgeting ---------------------------------------
    try:
        vmem_cap = int(pltpu.get_tpu_info().vmem_capacity_bytes)
    except Exception:
        vmem_cap = 64 * 1024 * 1024            # conservative (v7x per-core VMEM)
    vmem_budget = vmem_cap - 8 * 1024 * 1024   # leave compiler headroom

    f32b = 4
    mmb = mm_dtype.itemsize
    actb = jnp.dtype(x.dtype).itemsize
    outb = out_dtype.itemsize
    w_bytes = (2 * (3 * hidden * C + C * hidden + hidden * hidden)
               * max(mmb, f32b) + 6 * C * f32b)

    def _estimate(tn):
        # double-buffered I/O blocks + f32 temporaries + in-kernel mm casts
        return (2 * C * tn * actb + 2 * C * tn * outb + C * tn * mmb
                + 3 * hidden * tn * f32b                 # qkv / k,v projections
                + 2 * hidden * tn * (f32b + mmb)         # softmaxed q/k (+casts)
                + hidden * tn * (f32b + mmb)             # attn (+cast)
                + C * tn * f32b                          # y
                + hidden * hidden * f32b + 4 * hidden * f32b
                + w_bytes)

    use_tiled, tile_n = False, None
    if spatial_block is not None and int(spatial_block) < N:
        tile_n = int(spatial_block)
        if N % tile_n != 0:
            raise ValueError("spatial_block must divide H*W")
        use_tiled = True
    elif _estimate(N) > vmem_budget:
        cand = 4096
        while cand >= 128:
            if N % cand == 0 and _estimate(cand) <= vmem_budget:
                use_tiled, tile_n = True, cand
                break
            cand //= 2
        # If nothing fits / divides, fall back to the whole-N path.

    est = _estimate(tile_n if use_tiled else N)
    vmem_limit = int(min(vmem_budget, max(2 * est, 32 * 1024 * 1024)))

    weight_args = (wqkv2, wout2, bout2, gamma2, beta2, ctx_scale)

    if not use_tiled:
        kernel = functools.partial(_linear_attention_kernel_full, heads=heads,
                                   dim_head=dim_head, exp_dtype=exp_dt)
        out = pl.pallas_call(
            kernel,
            out_shape=jax.ShapeDtypeStruct((B, C, N), out_dtype),
            grid=(B,),
            in_specs=[
                pl.BlockSpec((1, C, N), lambda b: (b, 0, 0)),
                pl.BlockSpec((3 * hidden, C), lambda b: (0, 0)),
                pl.BlockSpec((C, hidden), lambda b: (0, 0)),
                pl.BlockSpec((C, 1), lambda b: (0, 0)),
                pl.BlockSpec((C, 1), lambda b: (0, 0)),
                pl.BlockSpec((C, 1), lambda b: (0, 0)),
                pl.BlockSpec((hidden, hidden), lambda b: (0, 0)),
            ],
            out_specs=pl.BlockSpec((1, C, N), lambda b: (b, 0, 0)),
            compiler_params=pltpu.CompilerParams(
                dimension_semantics=("parallel",),
                vmem_limit_bytes=vmem_limit),
            interpret=interpret,
        )(x, *weight_args)
    else:
        nt = N // tile_n
        kernel = functools.partial(_linear_attention_kernel_tiled, heads=heads,
                                   dim_head=dim_head, n_total=N,
                                   exp_dtype=exp_dt)
        out = pl.pallas_call(
            kernel,
            out_shape=jax.ShapeDtypeStruct((B, C, N), out_dtype),
            grid=(B, 3, nt),
            in_specs=[
                pl.BlockSpec((1, C, tile_n), lambda b, p, t: (b, 0, t)),
                pl.BlockSpec((3 * hidden, C), lambda b, p, t: (0, 0)),
                pl.BlockSpec((C, hidden), lambda b, p, t: (0, 0)),
                pl.BlockSpec((C, 1), lambda b, p, t: (0, 0)),
                pl.BlockSpec((C, 1), lambda b, p, t: (0, 0)),
                pl.BlockSpec((C, 1), lambda b, p, t: (0, 0)),
                pl.BlockSpec((hidden, hidden), lambda b, p, t: (0, 0)),
            ],
            # Phases 0/1 never touch the output: park the output index on tile 0
            # ((p // 2) * t == 0 for p < 2) so writebacks (which only happen on
            # index changes) occur only for phase-2-written, lane-dense blocks.
            out_specs=pl.BlockSpec((1, C, tile_n),
                                   lambda b, p, t: (b, 0, (p // 2) * t)),
            scratch_shapes=[
                pltpu.VMEM((hidden, 1), jnp.float32),        # running k max
                pltpu.VMEM((hidden, 1), jnp.float32),        # running k exp-sum
                pltpu.VMEM((hidden, hidden), jnp.float32),   # context accumulator
                pltpu.VMEM((1, 1), jnp.float32),             # GroupNorm sum
                pltpu.VMEM((1, 1), jnp.float32),             # GroupNorm sum-of-squares
            ],
            compiler_params=pltpu.CompilerParams(
                dimension_semantics=("parallel", "arbitrary", "arbitrary"),
                vmem_limit_bytes=vmem_limit),
            interpret=interpret,
        )(x, *weight_args)

    # (B, C, N) -> NCHW : pure reshape, no transpose.
    return out.reshape(B, C, Himg, Wimg)


# --------------------------------------------------------------------------- #
# Pure-JAX reference mirroring the PyTorch forward exactly.                    #
# --------------------------------------------------------------------------- #
def linear_attention_ref(x, wqkv, wout, bout, gamma, beta, *, heads, dim_head):
    B, C, H, W = x.shape
    hidden = heads * dim_head
    scale = dim_head ** (-0.5)
    n = H * W
    qkv = jnp.einsum('bchw,oc->bohw', x, wqkv.reshape(3 * hidden, C))
    q, k, v = jnp.split(qkv, 3, axis=1)
    rearr = lambda t: t.reshape(B, heads, dim_head, n)
    q, k, v = rearr(q), rearr(k), rearr(v)
    q = jax.nn.softmax(q, axis=-2) * scale
    k = jax.nn.softmax(k, axis=-1)
    v = v / n
    context = jnp.einsum('bhdn,bhen->bhde', k, v)
    out = jnp.einsum('bhde,bhdn->bhen', context, q)
    out = out.reshape(B, hidden, H, W)
    y = (jnp.einsum('bchw,oc->bohw', out, wout.reshape(C, hidden))
         + bout.reshape(1, C, 1, 1))
    mean = jnp.mean(y, axis=(1, 2, 3), keepdims=True)
    var = jnp.mean((y - mean) ** 2, axis=(1, 2, 3), keepdims=True)
    yn = (y - mean) / jnp.sqrt(var + 1e-5)
    return yn * gamma.reshape(1, C, 1, 1) + beta.reshape(1, C, 1, 1)


if __name__ == "__main__":
    B, C, H, W = 2, 4, 16, 16
    heads, dim_head = 4, 32
    hidden = heads * dim_head

    key = jax.random.PRNGKey(0)
    k1, k2, k3, k4, k5, k6 = jax.random.split(key, 6)
    x = jax.random.normal(k1, (B, C, H, W), jnp.float32)
    # Deterministic synthetic params in PyTorch Conv2d layout.
    wqkv = 0.1 * jax.random.normal(k2, (3 * hidden, C, 1, 1), jnp.float32)
    wout = 0.1 * jax.random.normal(k3, (C, hidden, 1, 1), jnp.float32)
    bout = 0.1 * jax.random.normal(k4, (C,), jnp.float32)
    gamma = 1.0 + 0.1 * jax.random.normal(k5, (C,), jnp.float32)
    beta = 0.1 * jax.random.normal(k6, (C,), jnp.float32)

    ref = linear_attention_ref(x, wqkv, wout, bout, gamma, beta,
                               heads=heads, dim_head=dim_head)

    # 1) whole-N fast path (f32).
    out_full = jax.block_until_ready(
        linear_attention(x, wqkv, wout, bout, gamma, beta,
                         heads=heads, dim_head=dim_head))
    assert out_full.shape == (B, C, H, W)
    err = float(jnp.max(jnp.abs(out_full - ref)))
    assert err < 2e-2, f"full path max abs err = {err}"

    # 2) N-tiled streaming path (the layout v7x uses at large feature maps).
    out_tiled = jax.block_until_ready(
        linear_attention(x, wqkv, wout, bout, gamma, beta,
                         heads=heads, dim_head=dim_head, spatial_block=128))
    err = float(jnp.max(jnp.abs(out_tiled - ref)))
    assert err < 2e-2, f"tiled path max abs err = {err}"

    # 3) bf16 MXU operands (recommended on v6e/v7x); f32 accumulation kept,
    #    output comes back bf16.  Looser tolerance vs. the f32 reference.
    out_bf16 = jax.block_until_ready(
        linear_attention(x, wqkv, wout, bout, gamma, beta,
                         heads=heads, dim_head=dim_head,
                         matmul_dtype=jnp.bfloat16))
    assert out_bf16.dtype == jnp.bfloat16
    ok = bool(jnp.allclose(out_bf16.astype(jnp.float32), ref,
                           atol=1e-1, rtol=1e-1))
    assert ok, "bf16 path mismatch vs f32 reference"

    print("KERNEL_OK")
</pallas_src>

<mosaic_0001>
module attributes {stable_mosaic.version = 11 : i64} {
  func.func @_linear_attention_kernel_full(%arg0: i32, %arg1: memref<1x4x256xf32, #tpu.memory_space<vmem>>, %arg2: memref<384x4xf32, #tpu.memory_space<vmem>>, %arg3: memref<4x128xf32, #tpu.memory_space<vmem>>, %arg4: memref<4x1xf32, #tpu.memory_space<vmem>>, %arg5: memref<4x1xf32, #tpu.memory_space<vmem>>, %arg6: memref<4x1xf32, #tpu.memory_space<vmem>>, %arg7: memref<128x128xf32, #tpu.memory_space<vmem>>, %arg8: memref<1x4x256xf32, #tpu.memory_space<vmem>>) attributes {dimension_semantics = [#tpu.dimension_semantics<parallel>], iteration_bounds = array<i64: 2>, scalar_prefetch = 0 : i64, scratch_operands = 0 : i64, tpu.core_type = #tpu.core_type<tc>, window_params = [{transform_indices = @transform_0, window_bounds = array<i64: 1, 4, 256>}, {pipeline_mode = #tpu.pipeline_mode<synchronous>, transform_indices = @transform_1, window_bounds = array<i64: 384, 4>}, {pipeline_mode = #tpu.pipeline_mode<synchronous>, transform_indices = @transform_2, window_bounds = array<i64: 4, 128>}, {pipeline_mode = #tpu.pipeline_mode<synchronous>, transform_indices = @transform_3, window_bounds = array<i64: 4, 1>}, {pipeline_mode = #tpu.pipeline_mode<synchronous>, transform_indices = @transform_4, window_bounds = array<i64: 4, 1>}, {pipeline_mode = #tpu.pipeline_mode<synchronous>, transform_indices = @transform_5, window_bounds = array<i64: 4, 1>}, {pipeline_mode = #tpu.pipeline_mode<synchronous>, transform_indices = @transform_6, window_bounds = array<i64: 128, 128>}, {transform_indices = @transform_7, window_bounds = array<i64: 1, 4, 256>}]} {
    %c0 = arith.constant 0 : index
    %c0_0 = arith.constant 0 : index
    %c0_1 = arith.constant 0 : index
    %0 = vector.load %arg1[%c0, %c0_0, %c0_1] : memref<1x4x256xf32, #tpu.memory_space<vmem>>, vector<1x4x256xf32>
    %1 = vector.shape_cast %0 : vector<1x4x256xf32> to vector<4x256xf32>
    %c0_2 = arith.constant 0 : index
    %c0_3 = arith.constant 0 : index
    %2 = vector.load %arg2[%c0_2, %c0_3] : memref<384x4xf32, #tpu.memory_space<vmem>>, vector<384x4xf32>
    %cst = arith.constant dense<0.000000e+00> : vector<384x256xf32>
    %3 = tpu.matmul %2, %1, %cst {dimension_numbers = #tpu.dot_dimension_numbers<[1], [0], [0], [1], [0, 0, 1, 1], [], []>} : vector<384x4xf32>, vector<4x256xf32>, vector<384x256xf32> -> vector<384x256xf32>
    %4 = vector.extract_strided_slice %3 {offsets = [0, 0], sizes = [128, 256], strides = [1, 1]} : vector<384x256xf32> to vector<128x256xf32>
    %5 = vector.extract_strided_slice %3 {offsets = [128, 0], sizes = [128, 256], strides = [1, 1]} : vector<384x256xf32> to vector<128x256xf32>
    %6 = vector.extract_strided_slice %3 {offsets = [256, 0], sizes = [128, 256], strides = [1, 1]} : vector<384x256xf32> to vector<128x256xf32>
    %7 = vector.shape_cast %4 : vector<128x256xf32> to vector<4x32x256xf32>
    %cst_4 = arith.constant dense<0xFF800000> : vector<4x256xf32>
    %8 = vector.multi_reduction <maximumf>, %7, %cst_4 [1] : vector<4x32x256xf32> to vector<4x256xf32>
    %9 = vector.shape_cast %8 : vector<4x256xf32> to vector<4x1x256xf32>
    %10 = vector.broadcast %9 : vector<4x1x256xf32> to vector<4x32x256xf32>
    %11 = arith.subf %7, %10 : vector<4x32x256xf32>
    %12 = math.exp %11 : vector<4x32x256xf32>
    %cst_5 = arith.constant dense<0.000000e+00> : vector<4x256xf32>
    %13 = vector.multi_reduction <add>, %12, %cst_5 [1] : vector<4x32x256xf32> to vector<4x256xf32>
    %14 = vector.shape_cast %13 : vector<4x256xf32> to vector<4x1x256xf32>
    %15 = tpu.reciprocal %14 {approx = true} : vector<4x1x256xf32> -> vector<4x1x256xf32>
    %16 = vector.broadcast %15 : vector<4x1x256xf32> to vector<4x32x256xf32>
    %17 = arith.mulf %12, %16 : vector<4x32x256xf32>
    %18 = vector.shape_cast %17 : vector<4x32x256xf32> to vector<128x256xf32>
    %cst_6 = arith.constant dense<0xFF800000> : vector<128xf32>
    %19 = vector.multi_reduction <maximumf>, %5, %cst_6 [1] : vector<128x256xf32> to vector<128xf32>
    %20 = vector.shape_cast %19 : vector<128xf32> to vector<128x1xf32>
    %21 = vector.broadcast %20 : vector<128x1xf32> to vector<128x256xf32>
    %22 = arith.subf %5, %21 : vector<128x256xf32>
    %23 = math.exp %22 : vector<128x256xf32>
    %cst_7 = arith.constant dense<0.000000e+00> : vector<128xf32>
    %24 = vector.multi_reduction <add>, %23, %cst_7 [1] : vector<128x256xf32> to vector<128xf32>
    %25 = vector.shape_cast %24 : vector<128xf32> to vector<128x1xf32>
    %cst_8 = arith.constant dense<0.000000e+00> : vector<128x128xf32>
    %26 = tpu.matmul %23, %6, %cst_8 {dimension_numbers = #tpu.dot_dimension_numbers<[1], [1], [0], [0], [0, 0, 1, 0], [], []>} : vector<128x256xf32>, vector<128x256xf32>, vector<128x128xf32> -> vector<128x128xf32>
    %c0_9 = arith.constant 0 : index
    %c0_10 = arith.constant 0 : index
    %27 = vector.load %arg7[%c0_9, %c0_10] : memref<128x128xf32, #tpu.memory_space<vmem>>, vector<128x128xf32>
    %28 = arith.mulf %26, %27 : vector<128x128xf32>
    %29 = tpu.reciprocal %25 {approx = true} : vector<128x1xf32> -> vector<128x1xf32>
    %30 = vector.broadcast %29 : vector<128x1xf32> to vector<128x128xf32>
    %31 = arith.mulf %28, %30 : vector<128x128xf32>
    %cst_11 = arith.constant dense<0.000000e+00> : vector<128x256xf32>
    %32 = tpu.matmul %31, %18, %cst_11 {dimension_numbers = #tpu.dot_dimension_numbers<[0], [0], [1], [1], [0, 1, 1, 1], [], []>} : vector<128x128xf32>, vector<128x256xf32>, vector<128x256xf32> -> vector<128x256xf32>
    %c0_12 = arith.constant 0 : index
    %c0_13 = arith.constant 0 : index
    %33 = vector.load %arg3[%c0_12, %c0_13] : memref<4x128xf32, #tpu.memory_space<vmem>>, vector<4x128xf32>
    %cst_14 = arith.constant dense<0.000000e+00> : vector<4x256xf32>
    %34 = tpu.matmul %33, %32, %cst_14 {dimension_numbers = #tpu.dot_dimension_numbers<[1], [0], [0], [1], [0, 0, 1, 1], [], []>} : vector<4x128xf32>, vector<128x256xf32>, vector<4x256xf32> -> vector<4x256xf32>
    %c0_15 = arith.constant 0 : index
    %c0_16 = arith.constant 0 : index
    %35 = vector.load %arg4[%c0_15, %c0_16] : memref<4x1xf32, #tpu.memory_space<vmem>>, vector<4x1xf32>
    %36 = vector.broadcast %35 : vector<4x1xf32> to vector<4x256xf32>
    %37 = arith.addf %34, %36 : vector<4x256xf32>
    %38 = vector.shape_cast %37 : vector<4x256xf32> to vector<1x4x256xf32>
    %cst_17 = arith.constant dense<0.000000e+00> : vector<1xf32>
    %39 = vector.multi_reduction <add>, %38, %cst_17 [1, 2] : vector<1x4x256xf32> to vector<1xf32>
    %40 = vector.shape_cast %39 : vector<1xf32> to vector<1x1x1xf32>
    %41 = vector.extract %40[0, 0, 0] : f32 from vector<1x1x1xf32>
    %42 = vector.broadcast %41 : f32 to vector<1x1xf32>
    %cst_18 = arith.constant 9.765625E-4 : f32
    %43 = vector.broadcast %cst_18 : f32 to vector<1x1xf32>
    %44 = arith.mulf %42, %43 : vector<1x1xf32>
    %45 = arith.mulf %37, %37 : vector<4x256xf32>
    %46 = vector.shape_cast %45 : vector<4x256xf32> to vector<1x4x256xf32>
    %cst_19 = arith.constant dense<0.000000e+00> : vector<1xf32>
    %47 = vector.multi_reduction <add>, %46, %cst_19 [1, 2] : vector<1x4x256xf32> to vector<1xf32>
    %48 = vector.shape_cast %47 : vector<1xf32> to vector<1x1x1xf32>
    %49 = vector.extract %48[0, 0, 0] : f32 from vector<1x1x1xf32>
    %50 = vector.broadcast %49 : f32 to vector<1x1xf32>
    %cst_20 = arith.constant 9.765625E-4 : f32
    %51 = vector.broadcast %cst_20 : f32 to vector<1x1xf32>
    %52 = arith.mulf %50, %51 : vector<1x1xf32>
    %53 = arith.mulf %44, %44 : vector<1x1xf32>
    %54 = arith.subf %52, %53 : vector<1x1xf32>
    %cst_21 = arith.constant 9.99999974E-6 : f32
    %55 = vector.broadcast %cst_21 : f32 to vector<1x1xf32>
    %56 = arith.addf %54, %55 : vector<1x1xf32>
    %57 = math.rsqrt %56 : vector<1x1xf32>
    %58 = vector.broadcast %44 : vector<1x1xf32> to vector<4x256xf32>
    %59 = arith.subf %37, %58 : vector<4x256xf32>
    %60 = vector.broadcast %57 : vector<1x1xf32> to vector<4x256xf32>
    %61 = arith.mulf %59, %60 : vector<4x256xf32>
    %c0_22 = arith.constant 0 : index
    %c0_23 = arith.constant 0 : index
    %62 = vector.load %arg5[%c0_22, %c0_23] : memref<4x1xf32, #tpu.memory_space<vmem>>, vector<4x1xf32>
    %63 = vector.broadcast %62 : vector<4x1xf32> to vector<4x256xf32>
    %64 = arith.mulf %61, %63 : vector<4x256xf32>
    %c0_24 = arith.constant 0 : index
    %c0_25 = arith.constant 0 : index
    %65 = vector.load %arg6[%c0_24, %c0_25] : memref<4x1xf32, #tpu.memory_space<vmem>>, vector<4x1xf32>
    %66 = vector.broadcast %65 : vector<4x1xf32> to vector<4x256xf32>
    %67 = arith.addf %64, %66 : vector<4x256xf32>
    %c0_26 = arith.constant 0 : index
    %c0_27 = arith.constant 0 : index
    %c0_28 = arith.constant 0 : index
    %68 = vector.load %arg8[%c0_26, %c0_27, %c0_28] : memref<1x4x256xf32, #tpu.memory_space<vmem>>, vector<1x4x256xf32>
    %69 = vector.shape_cast %68 : vector<1x4x256xf32> to vector<4x256xf32>
    %70 = vector.shape_cast %67 : vector<4x256xf32> to vector<1x4x256xf32>
    tpu.vector_store %arg8[%c0_26, %c0_27, %c0_28], %70 {strides = array<i32>} : memref<1x4x256xf32, #tpu.memory_space<vmem>>, vector<1x4x256xf32>,
    return
  }
  func.func @transform_0(%arg0: i32) -> (i32, i32, i32) {
    %c0_i32 = arith.constant 0 : i32
    %c0_i32_0 = arith.constant 0 : i32
    %c0_i32_1 = arith.constant 0 : i32
    return %arg0, %c0_i32, %c0_i32_0 : i32, i32, i32
  }
  func.func @transform_1(%arg0: i32) -> (i32, i32) {
    %c0_i32 = arith.constant 0 : i32
    %c0_i32_0 = arith.constant 0 : i32
    %c0_i32_1 = arith.constant 0 : i32
    return %c0_i32, %c0_i32_0 : i32, i32
  }
  func.func @transform_2(%arg0: i32) -> (i32, i32) {
    %c0_i32 = arith.constant 0 : i32
    %c0_i32_0 = arith.constant 0 : i32
    %c0_i32_1 = arith.constant 0 : i32
    return %c0_i32, %c0_i32_0 : i32, i32
  }
  func.func @transform_3(%arg0: i32) -> (i32, i32) {
    %c0_i32 = arith.constant 0 : i32
    %c0_i32_0 = arith.constant 0 : i32
    %c0_i32_1 = arith.constant 0 : i32
    return %c0_i32, %c0_i32_0 : i32, i32
  }
  func.func @transform_4(%arg0: i32) -> (i32, i32) {
    %c0_i32 = arith.constant 0 : i32
    %c0_i32_0 = arith.constant 0 : i32
    %c0_i32_1 = arith.constant 0 : i32
    return %c0_i32, %c0_i32_0 : i32, i32
  }
  func.func @transform_5(%arg0: i32) -> (i32, i32) {
    %c0_i32 = arith.constant 0 : i32
    %c0_i32_0 = arith.constant 0 : i32
    %c0_i32_1 = arith.constant 0 : i32
    return %c0_i32, %c0_i32_0 : i32, i32
  }
  func.func @transform_6(%arg0: i32) -> (i32, i32) {
    %c0_i32 = arith.constant 0 : i32
    %c0_i32_0 = arith.constant 0 : i32
    %c0_i32_1 = arith.constant 0 : i32
    return %c0_i32, %c0_i32_0 : i32, i32
  }
  func.func @transform_7(%arg0: i32) -> (i32, i32, i32) {
    %c0_i32 = arith.constant 0 : i32
    %c0_i32_0 = arith.constant 0 : i32
    %c0_i32_1 = arith.constant 0 : i32
    return %arg0, %c0_i32, %c0_i32_0 : i32, i32, i32
  }
}

</mosaic_0001>

<llo_original>
// kernel: tpu_custom_call.1
$region0: #{tpu_custom_call.1}
  #allocation0 [shape = 'u32[]', space=smem, size = 0x4, offset = 0x4, fixed_abs, tag = 'smem constant byte address 0x4 - core index']
  #allocation1 [shape = 'u32[72,128]{1,0:T(1,128)}', space=vmem, size = 0x9000, scoped, tag = 'internal scratch']
  %s0 = inlined_call_operand.vmem [shape: f32[2,4,256], index: 0, kind: input, shape index: {}]
  %s1 = inlined_call_operand.vmem [shape: f32[384,4], index: 1, kind: input, shape index: {}]
  %s2 = inlined_call_operand.vmem [shape: f32[4,128], index: 2, kind: input, shape index: {}]
  %s3 = inlined_call_operand.vmem [shape: f32[4,1], index: 3, kind: input, shape index: {}]
  %s4 = inlined_call_operand.vmem [shape: f32[4,1], index: 4, kind: input, shape index: {}]
  %s5 = inlined_call_operand.vmem [shape: f32[4,1], index: 5, kind: input, shape index: {}]
  %s6 = inlined_call_operand.vmem [shape: f32[128,128], index: 6, kind: input, shape index: {}]
  %s7 = inlined_call_operand.hbm [shape: f32[2,4,256], index: 7, kind: output, shape index: {}]
  %s8 = sld [smem:[#allocation0]]
  $region61: #{tpu_custom_call.1} parent=0
    _
  %s10 = ssub.s32 1, %s8
  %s11 = scalar_select 0, %s10, %s8
  $region1: #{tpu_custom_call.1} parent=0
    #allocation2 [shape = 'u8[8192]{0}', space=vmem, size = 0x2000, scoped, tag = 'output window, operand 0']
    #allocation3 [shape = 's32[2]{0}', space=sflag, size = 0x8, scoped, tag = 'scoped memory for tpu_custom_call.1']
    %12 = vsyncpa [#allocation3], 0
    %s13 = scalar_lea.sflag [#allocation3], 1
    %14 = vsyncpa %s13, 0
    loop: start=0, step=1, limit=4
    $region2: #{tpu_custom_call.1} parent=1 // loop_pre_header
      _
    $region3: #{tpu_custom_call.1} parent=1 // loop_header
      %s16 = sphi 0, %s20
      %p17 = scmp.ge.s32.totalorder %s16, 4
      %s26 = sphi 0, %s28
      %s29 = sphi 0, %s26
      %s30 = sphi 0, %s29
      %s46 = sphi 0, %s30
      %s50 = sphi 0, %s50
      %s52 = sphi 0, %s50
      %s53 = sphi 0, %s52
      %s67 = sphi 0, %s53
      %s71 = sphi 0, %s71
      %s73 = sphi 0, %s71
      %s74 = sphi 0, %s73
      %s88 = sphi 0, %s74
      %s92 = sphi 0, %s92
      %s94 = sphi 0, %s92
      %s95 = sphi 0, %s94
      %s109 = sphi 0, %s95
      %s113 = sphi 0, %s113
      %s115 = sphi 0, %s113
      %s116 = sphi 0, %s115
      %s130 = sphi 0, %s116
      %s134 = sphi 0, %s134
      %s136 = sphi 0, %s134
      %s137 = sphi 0, %s136
      %s151 = sphi 0, %s137
      %s155 = sphi 0, %s155
      %s157 = sphi 0, %s155
      %s158 = sphi 0, %s157
      %s172 = sphi 0, %s158
      %s178 = sphi 0, %s180
      %s181 = sphi 0, %s178
      %s182 = sphi 0, %s181
      %s198 = sphi 0, %s182
    $region4: #{tpu_custom_call.1} parent=1 // loop_header_branch
      %19 = sbr.rel (%p17) target = $region8
    $region5: #{tpu_custom_call.1} parent=1 // loop_body
      %s21 = ssub.s32 %s16, 1
      %s22 = ssub.s32 %s16, 2
      %s23 = sadd.s32 %s16, 1
      %s24 = ssub.s32 %s16, %s23
      %p25 = scmp.eq.s32.totalorder %s24, 0
      %s27 = sadd.s32 %s26, 1
      %s28 = scalar_select %p25, %s26, %s27
      %p31 = pneg %p25
      %p32 = scmp.eq.s32.totalorder %s16, 1
      %p33 = por %p31, %p32
      %p34 = scmp.ne.s32.totalorder %s26, %s29
      %p35 = scmp.eq.s32.totalorder %s16, 0
      %p36 = por %p34, %p35
      %p37 = scmp.ne.s32.totalorder %s26, %s29
      %p38 = scmp.eq.s32.totalorder %s21, 1
      %p39 = por %p37, %p38
      %p40 = scmp.ne.s32.totalorder %s29, %s30
      %p41 = scmp.eq.s32.totalorder %s21, 0
      %p42 = por %p40, %p41
      %p43 = scmp.ne.s32.totalorder %s29, %s30
      %p44 = scmp.eq.s32.totalorder %s22, 1
      %p45 = por %p43, %p44
      %p47 = scmp.ne.s32.totalorder %s30, %s46
      %p48 = scmp.eq.s32.totalorder %s22, 0
      %p49 = por %p47, %p48
      %s51 = sadd.s32 %s50, 1
      %p54 = scmp.eq.s32.totalorder %s16, 1
      %p55 = scmp.ne.s32.totalorder %s50, %s52
      %p56 = scmp.eq.s32.totalorder %s16, 0
      %p57 = por %p55, %p56
      %p58 = scmp.ne.s32.totalorder %s50, %s52
      %p59 = scmp.eq.s32.totalorder %s21, 1
      %p60 = por %p58, %p59
      %p61 = scmp.ne.s32.totalorder %s52, %s53
      %p62 = scmp.eq.s32.totalorder %s21, 0
      %p63 = por %p61, %p62
      %p64 = scmp.ne.s32.totalorder %s52, %s53
      %p65 = scmp.eq.s32.totalorder %s22, 1
      %p66 = por %p64, %p65
      %p68 = scmp.ne.s32.totalorder %s53, %s67
      %p69 = scmp.eq.s32.totalorder %s22, 0
      %p70 = por %p68, %p69
      %s72 = sadd.s32 %s71, 1
      %p75 = scmp.eq.s32.totalorder %s16, 1
      %p76 = scmp.ne.s32.totalorder %s71, %s73
      %p77 = scmp.eq.s32.totalorder %s16, 0
      %p78 = por %p76, %p77
      %p79 = scmp.ne.s32.totalorder %s71, %s73
      %p80 = scmp.eq.s32.totalorder %s21, 1
      %p81 = por %p79, %p80
      %p82 = scmp.ne.s32.totalorder %s73, %s74
      %p83 = scmp.eq.s32.totalorder %s21, 0
      %p84 = por %p82, %p83
      %p85 = scmp.ne.s32.totalorder %s73, %s74
      %p86 = scmp.eq.s32.totalorder %s22, 1
      %p87 = por %p85, %p86
      %p89 = scmp.ne.s32.totalorder %s74, %s88
      %p90 = scmp.eq.s32.totalorder %s22, 0
      %p91 = por %p89, %p90
      %s93 = sadd.s32 %s92, 1
      %p96 = scmp.eq.s32.totalorder %s16, 1
      %p97 = scmp.ne.s32.totalorder %s92, %s94
      %p98 = scmp.eq.s32.totalorder %s16, 0
      %p99 = por %p97, %p98
      %p100 = scmp.ne.s32.totalorder %s92, %s94
      %p101 = scmp.eq.s32.totalorder %s21, 1
      %p102 = por %p100, %p101
      %p103 = scmp.ne.s32.totalorder %s94, %s95
      %p104 = scmp.eq.s32.totalorder %s21, 0
      %p105 = por %p103, %p104
      %p106 = scmp.ne.s32.totalorder %s94, %s95
      %p107 = scmp.eq.s32.totalorder %s22, 1
      %p108 = por %p106, %p107
      %p110 = scmp.ne.s32.totalorder %s95, %s109
      %p111 = scmp.eq.s32.totalorder %s22, 0
      %p112 = por %p110, %p111
      %s114 = sadd.s32 %s113, 1
      %p117 = scmp.eq.s32.totalorder %s16, 1
      %p118 = scmp.ne.s32.totalorder %s113, %s115
      %p119 = scmp.eq.s32.totalorder %s16, 0
      %p120 = por %p118, %p119
      %p121 = scmp.ne.s32.totalorder %s113, %s115
      %p122 = scmp.eq.s32.totalorder %s21, 1
      %p123 = por %p121, %p122
      %p124 = scmp.ne.s32.totalorder %s115, %s116
      %p125 = scmp.eq.s32.totalorder %s21, 0
      %p126 = por %p124, %p125
      %p127 = scmp.ne.s32.totalorder %s115, %s116
      %p128 = scmp.eq.s32.totalorder %s22, 1
      %p129 = por %p127, %p128
      %p131 = scmp.ne.s32.totalorder %s116, %s130
      %p132 = scmp.eq.s32.totalorder %s22, 0
      %p133 = por %p131, %p132
      %s135 = sadd.s32 %s134, 1
      %p138 = scmp.eq.s32.totalorder %s16, 1
      %p139 = scmp.ne.s32.totalorder %s134, %s136
      %p140 = scmp.eq.s32.totalorder %s16, 0
      %p141 = por %p139, %p140
      %p142 = scmp.ne.s32.totalorder %s134, %s136
      %p143 = scmp.eq.s32.totalorder %s21, 1
      %p144 = por %p142, %p143
      %p145 = scmp.ne.s32.totalorder %s136, %s137
      %p146 = scmp.eq.s32.totalorder %s21, 0
      %p147 = por %p145, %p146
      %p148 = scmp.ne.s32.totalorder %s136, %s137
      %p149 = scmp.eq.s32.totalorder %s22, 1
      %p150 = por %p148, %p149
      %p152 = scmp.ne.s32.totalorder %s137, %s151
      %p153 = scmp.eq.s32.totalorder %s22, 0
      %p154 = por %p152, %p153
      %s156 = sadd.s32 %s155, 1
      %p159 = scmp.eq.s32.totalorder %s16, 1
      %p160 = scmp.ne.s32.totalorder %s155, %s157
      %p161 = scmp.eq.s32.totalorder %s16, 0
      %p162 = por %p160, %p161
      %p163 = scmp.ne.s32.totalorder %s155, %s157
      %p164 = scmp.eq.s32.totalorder %s21, 1
      %p165 = por %p163, %p164
      %p166 = scmp.ne.s32.totalorder %s157, %s158
      %p167 = scmp.eq.s32.totalorder %s21, 0
      %p168 = por %p166, %p167
      %p169 = scmp.ne.s32.totalorder %s157, %s158
      %p170 = scmp.eq.s32.totalorder %s22, 1
      %p171 = por %p169, %p170
      %p173 = scmp.ne.s32.totalorder %s158, %s172
      %p174 = scmp.eq.s32.totalorder %s22, 0
      %p175 = por %p173, %p174
      %s176 = ssub.s32 %s16, %s23
      %p177 = scmp.eq.s32.totalorder %s176, 0
      %s179 = sadd.s32 %s178, 1
      %s180 = scalar_select %p177, %s178, %s179
      %p183 = pneg %p177
      %p184 = scmp.eq.s32.totalorder %s16, 1
      %p185 = por %p183, %p184
      %p186 = scmp.ne.s32.totalorder %s178, %s181
      %p187 = scmp.eq.s32.totalorder %s16, 0
      %p188 = por %p186, %p187
      %p189 = scmp.ne.s32.totalorder %s178, %s181
      %p190 = scmp.eq.s32.totalorder %s21, 1
      %p191 = por %p189, %p190
      %p192 = scmp.ne.s32.totalorder %s181, %s182
      %p193 = scmp.eq.s32.totalorder %s21, 0
      %p194 = por %p192, %p193
      %p195 = scmp.ne.s32.totalorder %s181, %s182
      %p196 = scmp.eq.s32.totalorder %s22, 1
      %p197 = por %p195, %p196
      %p199 = scmp.ne.s32.totalorder %s182, %s198
      %p200 = scmp.eq.s32.totalorder %s22, 0
      %p201 = por %p199, %p200
      %p202 = scmp.le.s32.totalorder 1, %s16
      %p203 = scmp.lt.s32.totalorder %s16, 3
      %p204 = pnand %p202, %p203
      %p205 = pneg %p204
      // Predicated region
      $region9: #{tpu_custom_call.1} parent=5 // pred_check
        _
      $region10: #{tpu_custom_call.1} parent=5 // pred_check_branch
        %207 = sbr.rel (%p204) target = $region12
      $region11: #{tpu_custom_call.1} parent=5 // pred_region
        %s208 = ssub.s32 %s16, 1
        // Predicated region
        $region13: #{tpu_custom_call.1} parent=11 // pred_check
          %p209 = pneg %p63
        $region14: #{tpu_custom_call.1} parent=11 // pred_check_branch
          %211 = sbr.rel (%p209) target = $region16
        $region15: #{tpu_custom_call.1} parent=11 // pred_region
          _
        $region16: #{tpu_custom_call.1} parent=11 // pred_fallthru
          _
        // Predicated region
        $region17: #{tpu_custom_call.1} parent=11 // pred_check
          %p212 = pneg %p84
        $region18: #{tpu_custom_call.1} parent=11 // pred_check_branch
          %214 = sbr.rel (%p212) target = $region20
        $region19: #{tpu_custom_call.1} parent=11 // pred_region
          _
        $region20: #{tpu_custom_call.1} parent=11 // pred_fallthru
          _
        // Predicated region
        $region21: #{tpu_custom_call.1} parent=11 // pred_check
          %p215 = pneg %p105
        $region22: #{tpu_custom_call.1} parent=11 // pred_check_branch
          %217 = sbr.rel (%p215) target = $region24
        $region23: #{tpu_custom_call.1} parent=11 // pred_region
          _
        $region24: #{tpu_custom_call.1} parent=11 // pred_fallthru
          _
        // Predicated region
        $region25: #{tpu_custom_call.1} parent=11 // pred_check
          %p218 = pneg %p126
        $region26: #{tpu_custom_call.1} parent=11 // pred_check_branch
          %220 = sbr.rel (%p218) target = $region28
        $region27: #{tpu_custom_call.1} parent=11 // pred_region
          _
        $region28: #{tpu_custom_call.1} parent=11 // pred_fallthru
          _
        // Predicated region
        $region29: #{tpu_custom_call.1} parent=11 // pred_check
          %p221 = pneg %p147
        $region30: #{tpu_custom_call.1} parent=11 // pred_check_branch
          %223 = sbr.rel (%p221) target = $region32
        $region31: #{tpu_custom_call.1} parent=11 // pred_region
          _
        $region32: #{tpu_custom_call.1} parent=11 // pred_fallthru
          _
        // Predicated region
        $region33: #{tpu_custom_call.1} parent=11 // pred_check
          %p224 = pneg %p168
        $region34: #{tpu_custom_call.1} parent=11 // pred_check_branch
          %226 = sbr.rel (%p224) target = $region36
        $region35: #{tpu_custom_call.1} parent=11 // pred_region
          _
        $region36: #{tpu_custom_call.1} parent=11 // pred_fallthru
          _
      $region12: #{tpu_custom_call.1} parent=5 // pred_fallthru
        _
      %p227 = scmp.lt.s32.totalorder %s16, 2
      // Predicated region
      $region37: #{tpu_custom_call.1} parent=5 // pred_check
        %p228 = pneg %p227
      $region38: #{tpu_custom_call.1} parent=5 // pred_check_branch
        %230 = sbr.rel (%p228) target = $region40
      $region39: #{tpu_custom_call.1} parent=5 // pred_region
        // Predicated region
        $region41: #{tpu_custom_call.1} parent=39 // pred_check
          %p231 = pneg %p36
        $region42: #{tpu_custom_call.1} parent=39 // pred_check_branch
          %233 = sbr.rel (%p231) target = $region44
        $region43: #{tpu_custom_call.1} parent=39 // pred_region
          %p234 = scmp.lt.s32.totalorder %s16, 1
          %s235 = scalar_select %p234, %s16, 1
          %s236 = smul.addr %s235, 2
          %s237 = smul.addr %s236, 4
          %s238 = scalar_lea.vmem %s0, %s237
        $region44: #{tpu_custom_call.1} parent=39 // pred_fallthru
          _
      $region40: #{tpu_custom_call.1} parent=5 // pred_fallthru
        _
      %p239 = scmp.le.s32.totalorder 1, %s16
      %p240 = scmp.lt.s32.totalorder %s16, 3
      %p241 = pnand %p239, %p240
      %p242 = pneg %p241
      // Predicated region
      $region45: #{tpu_custom_call.1} parent=5 // pred_check
        _
      $region46: #{tpu_custom_call.1} parent=5 // pred_check_branch
        %244 = sbr.rel (%p241) target = $region48
      $region47: #{tpu_custom_call.1} parent=5 // pred_region
        %s245 = ssub.s32 %s16, 1
        %p246 = scmp.lt.s32.totalorder %s21, 1
        %s247 = scalar_select %p246, %s21, 1
        %s248 = smul.addr %s247, 2
        %s249 = smul.addr %s248, 4
        %s250 = scalar_lea.vmem %s0, %s249
        %p251 = pneg %p42
        %p252 = pneg %p39
        %p253 = pneg %p63
        %p254 = pneg %p60
        %p255 = pneg %p84
        %p256 = pneg %p81
        %p257 = pneg %p105
        %p258 = pneg %p102
        %p259 = pneg %p126
        %p260 = pneg %p123
        %p261 = pneg %p147
        %p262 = pneg %p144
        %p263 = pneg %p168
        %p264 = pneg %p165
        %p265 = pneg %p194
        %p266 = pneg %p191
        %s267 = sand.u32 %s181, 1
        %s268 = scalar_lea.sflag [#allocation3], %s267
        %s269 = sand.u32 %s181, 1
        %s270 = smul.addr %s269, 8
        %s271 = scalar_lea.vmem [#allocation2], %s270
        %p272 = scmp.lt.s32.totalorder %s21, 1
        %s273 = scalar_select %p272, %s21, 1
        %s274 = smul.addr %s273, 2
        %s275 = smul.addr %s274, 4
        %s276 = scalar_lea.vmem %s0, %s275
        %v277 = vld [vmem:[%s276] sm:$0xff]
        %v278 = vld [vmem:[%s1] sm:$0xff]
        %v279 = vld [vmem:[%s1 + $0x8] sm:$0xff]
        %v280 = vld [vmem:[%s1 + $0x10] sm:$0xff]
        %v281 = vld [vmem:[%s1 + $0x18] sm:$0xff]
        %v282 = vld [vmem:[%s1 + $0x20] sm:$0xff]
        %v283 = vld [vmem:[%s1 + $0x28] sm:$0xff]
        %v284 = vld [vmem:[%s1 + $0x30] sm:$0xff]
        %v285 = vld [vmem:[%s1 + $0x38] sm:$0xff]
        %v286 = vld [vmem:[%s1 + $0x40] sm:$0xff]
        %v287 = vld [vmem:[%s1 + $0x48] sm:$0xff]
        %v288 = vld [vmem:[%s1 + $0x50] sm:$0xff]
        %v289 = vld [vmem:[%s1 + $0x58] sm:$0xff]
        %v290 = vld [vmem:[%s1 + $0x60] sm:$0xff]
        %v291 = vld [vmem:[%s1 + $0x68] sm:$0xff]
        %v292 = vld [vmem:[%s1 + $0x70] sm:$0xff]
        %v293 = vld [vmem:[%s1 + $0x78] sm:$0xff]
        %v294 = vld [vmem:[%s1 + $0x80] sm:$0xff]
        %v295 = vld [vmem:[%s1 + $0x88] sm:$0xff]
        %v296 = vld [vmem:[%s1 + $0x90] sm:$0xff]
        %v297 = vld [vmem:[%s1 + $0x98] sm:$0xff]
        %v298 = vld [vmem:[%s1 + $0xa0] sm:$0xff]
        %v299 = vld [vmem:[%s1 + $0xa8] sm:$0xff]
        %v300 = vld [vmem:[%s1 + $0xb0] sm:$0xff]
        %v301 = vld [vmem:[%s1 + $0xb8] sm:$0xff]
        %v302 = vld [vmem:[%s1 + $0xc0] sm:$0xff]
        %v303 = vld [vmem:[%s1 + $0xc8] sm:$0xff]
        %v304 = vld [vmem:[%s1 + $0xd0] sm:$0xff]
        %v305 = vld [vmem:[%s1 + $0xd8] sm:$0xff]
        %v306 = vld [vmem:[%s1 + $0xe0] sm:$0xff]
        %v307 = vld [vmem:[%s1 + $0xe8] sm:$0xff]
        %v308 = vld [vmem:[%s1 + $0xf0] sm:$0xff]
        %v309 = vld [vmem:[%s1 + $0xf8] sm:$0xff]
        %v310 = vld [vmem:[%s1 + $0x100] sm:$0xff]
        %v311 = vld [vmem:[%s1 + $0x108] sm:$0xff]
        %v312 = vld [vmem:[%s1 + $0x110] sm:$0xff]
        %v313 = vld [vmem:[%s1 + $0x118] sm:$0xff]
        %v314 = vld [vmem:[%s1 + $0x120] sm:$0xff]
        %v315 = vld [vmem:[%s1 + $0x128] sm:$0xff]
        %v316 = vld [vmem:[%s1 + $0x130] sm:$0xff]
        %v317 = vld [vmem:[%s1 + $0x138] sm:$0xff]
        %v318 = vld [vmem:[%s1 + $0x140] sm:$0xff]
        %v319 = vld [vmem:[%s1 + $0x148] sm:$0xff]
        %v320 = vld [vmem:[%s1 + $0x150] sm:$0xff]
        %v321 = vld [vmem:[%s1 + $0x158] sm:$0xff]
        %v322 = vld [vmem:[%s1 + $0x160] sm:$0xff]
        %v323 = vld [vmem:[%s1 + $0x168] sm:$0xff]
        %v324 = vld [vmem:[%s1 + $0x170] sm:$0xff]
        %v325 = vld [vmem:[%s1 + $0x178] sm:$0xff]
        %327 = vst [vmem:[#allocation1] ss:$2 sm:$0xff] %v277
        %v328 = vld.sshfl [vmem:[#allocation1] sm:$0xff pattern:$0x75316420]
        %v329 = vld.sshfl [vmem:[#allocation1 + $0x8] sm:$0xff pattern:$0x75316420]
        %vm330 = vcmask 31744
        %v332 = vsel %vm330, %v278, 0
        %v335 = vsel %vm330, %v279, 0
        %v338 = vsel %vm330, %v280, 0
        %v341 = vsel %vm330, %v281, 0
        %v344 = vsel %vm330, %v282, 0
        %v347 = vsel %vm330, %v283, 0
        %v350 = vsel %vm330, %v284, 0
        %v353 = vsel %vm330, %v285, 0
        %v356 = vsel %vm330, %v286, 0
        %v359 = vsel %vm330, %v287, 0
        %v362 = vsel %vm330, %v288, 0
        %v365 = vsel %vm330, %v289, 0
        %v368 = vsel %vm330, %v290, 0
        %v371 = vsel %vm330, %v291, 0
        %v374 = vsel %vm330, %v292, 0
        %v377 = vsel %vm330, %v293, 0
        %v380 = vsel %vm330, %v294, 0
        %v383 = vsel %vm330, %v295, 0
        %v386 = vsel %vm330, %v296, 0
        %v389 = vsel %vm330, %v297, 0
        %v392 = vsel %vm330, %v298, 0
        %v395 = vsel %vm330, %v299, 0
        %v398 = vsel %vm330, %v300, 0
        %v401 = vsel %vm330, %v301, 0
        %v404 = vsel %vm330, %v302, 0
        %v407 = vsel %vm330, %v303, 0
        %v410 = vsel %vm330, %v304, 0
        %v413 = vsel %vm330, %v305, 0
        %v416 = vsel %vm330, %v306, 0
        %v419 = vsel %vm330, %v307, 0
        %v422 = vsel %vm330, %v308, 0
        %v425 = vsel %vm330, %v309, 0
        %v428 = vsel %vm330, %v310, 0
        %v431 = vsel %vm330, %v311, 0
        %v434 = vsel %vm330, %v312, 0
        %v437 = vsel %vm330, %v313, 0
        %v440 = vsel %vm330, %v314, 0
        %v443 = vsel %vm330, %v315, 0
        %v446 = vsel %vm330, %v316, 0
        %v449 = vsel %vm330, %v317, 0
        %v452 = vsel %vm330, %v318, 0
        %v455 = vsel %vm330, %v319, 0
        %v458 = vsel %vm330, %v320, 0
        %v461 = vsel %vm330, %v321, 0
        %v464 = vsel %vm330, %v322, 0
        %v467 = vsel %vm330, %v323, 0
        %v470 = vsel %vm330, %v324, 0
        %v473 = vsel %vm330, %v325, 0
        %vm475 = vcmask 1043456
        %v476 = vsel %vm475, %v328, 0
        %v478 = vsel %vm475, %v329, 0
        %480 = vmatpush.msra.mxu0 0.0
        %481 = vmatpush.msra.mxu0 0.0
        %482 = vmatpush.msra.mxu0 0.0
        %483 = vmatpush.msra.mxu0 0.0
        %484 = vmatpush.msra.mxu0 0.0
        %485 = vmatpush.msra.mxu0 0.0
        %486 = vmatpush.msra.mxu0 0.0
        %487 = vmatpush.msra.mxu0 0.0
        %488 = vmatpush.msra.mxu0 0.0
        %489 = vmatpush.msra.mxu0 0.0
        %490 = vmatpush.msra.mxu0 0.0
        %491 = vmatpush.msra.mxu0 0.0
        %492 = vmatpush.msra.mxu0 0.0
        %493 = vmatpush.msra.mxu0 0.0
        %494 = vmatpush.msra.mxu0 0.0
        %495 = vmatpush.msra.mxu0 %v476
        %496 = vmatmul.f32.gmra.mxu0 %v332
        %v497 = vpop.f32.mrf.mxu0
        %v498 = vadd.f32 0.0, %v497
        %499 = vmatmul.f32.gmra.mxu0 %v335
        %v500 = vpop.f32.mrf.mxu0
        %v501 = vadd.f32 0.0, %v500
        %502 = vmatmul.f32.gmra.mxu0 %v338
        %v503 = vpop.f32.mrf.mxu0
        %v504 = vadd.f32 0.0, %v503
        %505 = vmatmul.f32.gmra.mxu0 %v341
        %v506 = vpop.f32.mrf.mxu0
        %v507 = vadd.f32 0.0, %v506
        %508 = vmatmul.f32.gmra.mxu0 %v344
        %v509 = vpop.f32.mrf.mxu0
        %v510 = vadd.f32 0.0, %v509
        %511 = vmatmul.f32.gmra.mxu0 %v347
        %v512 = vpop.f32.mrf.mxu0
        %v513 = vadd.f32 0.0, %v512
        %514 = vmatmul.f32.gmra.mxu0 %v350
        %v515 = vpop.f32.mrf.mxu0
        %v516 = vadd.f32 0.0, %v515
        %517 = vmatmul.f32.gmra.mxu0 %v353
        %v518 = vpop.f32.mrf.mxu0
        %v519 = vadd.f32 0.0, %v518
        %520 = vmatmul.f32.gmra.mxu0 %v356
        %v521 = vpop.f32.mrf.mxu0
        %v522 = vadd.f32 0.0, %v521
        %523 = vmatmul.f32.gmra.mxu0 %v359
        %v524 = vpop.f32.mrf.mxu0
        %v525 = vadd.f32 0.0, %v524
        %526 = vmatmul.f32.gmra.mxu0 %v362
        %v527 = vpop.f32.mrf.mxu0
        %v528 = vadd.f32 0.0, %v527
        %529 = vmatmul.f32.gmra.mxu0 %v365
        %v530 = vpop.f32.mrf.mxu0
        %v531 = vadd.f32 0.0, %v530
        %532 = vmatmul.f32.gmra.mxu0 %v368
        %v533 = vpop.f32.mrf.mxu0
        %v534 = vadd.f32 0.0, %v533
        %535 = vmatmul.f32.gmra.mxu0 %v371
        %v536 = vpop.f32.mrf.mxu0
        %v537 = vadd.f32 0.0, %v536
        %538 = vmatmul.f32.gmra.mxu0 %v374
        %v539 = vpop.f32.mrf.mxu0
        %v540 = vadd.f32 0.0, %v539
        %541 = vmatmul.f32.gmra.mxu0 %v377
        %v542 = vpop.f32.mrf.mxu0
        %v543 = vadd.f32 0.0, %v542
        %544 = vmatmul.f32.gmra.mxu0 %v380
        %v545 = vpop.f32.mrf.mxu0
        %v546 = vadd.f32 0.0, %v545
        %547 = vmatmul.f32.gmra.mxu0 %v383
        %v548 = vpop.f32.mrf.mxu0
        %v549 = vadd.f32 0.0, %v548
        %550 = vmatmul.f32.gmra.mxu0 %v386
        %v551 = vpop.f32.mrf.mxu0
        %v552 = vadd.f32 0.0, %v551
        %553 = vmatmul.f32.gmra.mxu0 %v389
        %v554 = vpop.f32.mrf.mxu0
        %v555 = vadd.f32 0.0, %v554
        %556 = vmatmul.f32.gmra.mxu0 %v392
        %v557 = vpop.f32.mrf.mxu0
        %v558 = vadd.f32 0.0, %v557
        %559 = vmatmul.f32.gmra.mxu0 %v395
        %v560 = vpop.f32.mrf.mxu0
        %v561 = vadd.f32 0.0, %v560
        %562 = vmatmul.f32.gmra.mxu0 %v398
        %v563 = vpop.f32.mrf.mxu0
        %v564 = vadd.f32 0.0, %v563
        %565 = vmatmul.f32.gmra.mxu0 %v401
        %v566 = vpop.f32.mrf.mxu0
        %v567 = vadd.f32 0.0, %v566
        %568 = vmatmul.f32.gmra.mxu0 %v404
        %v569 = vpop.f32.mrf.mxu0
        %v570 = vadd.f32 0.0, %v569
        %571 = vmatmul.f32.gmra.mxu0 %v407
        %v572 = vpop.f32.mrf.mxu0
        %v573 = vadd.f32 0.0, %v572
        %574 = vmatmul.f32.gmra.mxu0 %v410
        %v575 = vpop.f32.mrf.mxu0
        %v576 = vadd.f32 0.0, %v575
        %577 = vmatmul.f32.gmra.mxu0 %v413
        %v578 = vpop.f32.mrf.mxu0
        %v579 = vadd.f32 0.0, %v578
        %580 = vmatmul.f32.gmra.mxu0 %v416
        %v581 = vpop.f32.mrf.mxu0
        %v582 = vadd.f32 0.0, %v581
        %583 = vmatmul.f32.gmra.mxu0 %v419
        %v584 = vpop.f32.mrf.mxu0
        %v585 = vadd.f32 0.0, %v584
        %586 = vmatmul.f32.gmra.mxu0 %v422
        %v587 = vpop.f32.mrf.mxu0
        %v588 = vadd.f32 0.0, %v587
        %589 = vmatmul.f32.gmra.mxu0 %v425
        %v590 = vpop.f32.mrf.mxu0
        %v591 = vadd.f32 0.0, %v590
        %592 = vmatmul.f32.gmra.mxu0 %v428
        %v593 = vpop.f32.mrf.mxu0
        %v594 = vadd.f32 0.0, %v593
        %595 = vmatmul.f32.gmra.mxu0 %v431
        %v596 = vpop.f32.mrf.mxu0
        %v597 = vadd.f32 0.0, %v596
        %598 = vmatmul.f32.gmra.mxu0 %v434
        %v599 = vpop.f32.mrf.mxu0
        %v600 = vadd.f32 0.0, %v599
        %601 = vmatmul.f32.gmra.mxu0 %v437
        %v602 = vpop.f32.mrf.mxu0
        %v603 = vadd.f32 0.0, %v602
        %604 = vmatmul.f32.gmra.mxu0 %v440
        %v605 = vpop.f32.mrf.mxu0
        %v606 = vadd.f32 0.0, %v605
        %607 = vmatmul.f32.gmra.mxu0 %v443
        %v608 = vpop.f32.mrf.mxu0
        %v609 = vadd.f32 0.0, %v608
        %610 = vmatmul.f32.gmra.mxu0 %v446
        %v611 = vpop.f32.mrf.mxu0
        %v612 = vadd.f32 0.0, %v611
        %613 = vmatmul.f32.gmra.mxu0 %v449
        %v614 = vpop.f32.mrf.mxu0
        %v615 = vadd.f32 0.0, %v614
        %616 = vmatmul.f32.gmra.mxu0 %v452
        %v617 = vpop.f32.mrf.mxu0
        %v618 = vadd.f32 0.0, %v617
        %619 = vmatmul.f32.gmra.mxu0 %v455
        %v620 = vpop.f32.mrf.mxu0
        %v621 = vadd.f32 0.0, %v620
        %622 = vmatmul.f32.gmra.mxu0 %v458
        %v623 = vpop.f32.mrf.mxu0
        %v624 = vadd.f32 0.0, %v623
        %625 = vmatmul.f32.gmra.mxu0 %v461
        %v626 = vpop.f32.mrf.mxu0
        %v627 = vadd.f32 0.0, %v626
        %628 = vmatmul.f32.gmra.mxu0 %v464
        %v629 = vpop.f32.mrf.mxu0
        %v630 = vadd.f32 0.0, %v629
        %631 = vmatmul.f32.gmra.mxu0 %v467
        %v632 = vpop.f32.mrf.mxu0
        %v633 = vadd.f32 0.0, %v632
        %634 = vmatmul.f32.gmra.mxu0 %v470
        %v635 = vpop.f32.mrf.mxu0
        %v636 = vadd.f32 0.0, %v635
        %637 = vmatmul.f32.gmra.mxu0 %v473
        %v638 = vpop.f32.mrf.mxu0
        %v639 = vadd.f32 0.0, %v638
        %640 = vdwg.mxu0
        %641 = vmatpush.msra.mxu0 0.0
        %642 = vmatpush.msra.mxu0 0.0
        %643 = vmatpush.msra.mxu0 0.0
        %644 = vmatpush.msra.mxu0 0.0
        %645 = vmatpush.msra.mxu0 0.0
        %646 = vmatpush.msra.mxu0 0.0
        %647 = vmatpush.msra.mxu0 0.0
        %648 = vmatpush.msra.mxu0 0.0
        %649 = vmatpush.msra.mxu0 0.0
        %650 = vmatpush.msra.mxu0 0.0
        %651 = vmatpush.msra.mxu0 0.0
        %652 = vmatpush.msra.mxu0 0.0
        %653 = vmatpush.msra.mxu0 0.0
        %654 = vmatpush.msra.mxu0 0.0
        %655 = vmatpush.msra.mxu0 0.0
        %656 = vmatpush.msra.mxu0 %v478
        %657 = vmatmul.f32.gmra.mxu0 %v332
        %v658 = vpop.f32.mrf.mxu0
        %v659 = vadd.f32 0.0, %v658
        %660 = vmatmul.f32.gmra.mxu0 %v335
        %v661 = vpop.f32.mrf.mxu0
        %v662 = vadd.f32 0.0, %v661
        %663 = vmatmul.f32.gmra.mxu0 %v338
        %v664 = vpop.f32.mrf.mxu0
        %v665 = vadd.f32 0.0, %v664
        %666 = vmatmul.f32.gmra.mxu0 %v341
        %v667 = vpop.f32.mrf.mxu0
        %v668 = vadd.f32 0.0, %v667
        %669 = vmatmul.f32.gmra.mxu0 %v344
        %v670 = vpop.f32.mrf.mxu0
        %v671 = vadd.f32 0.0, %v670
        %672 = vmatmul.f32.gmra.mxu0 %v347
        %v673 = vpop.f32.mrf.mxu0
        %v674 = vadd.f32 0.0, %v673
        %675 = vmatmul.f32.gmra.mxu0 %v350
        %v676 = vpop.f32.mrf.mxu0
        %v677 = vadd.f32 0.0, %v676
        %678 = vmatmul.f32.gmra.mxu0 %v353
        %v679 = vpop.f32.mrf.mxu0
        %v680 = vadd.f32 0.0, %v679
        %681 = vmatmul.f32.gmra.mxu0 %v356
        %v682 = vpop.f32.mrf.mxu0
        %v683 = vadd.f32 0.0, %v682
        %684 = vmatmul.f32.gmra.mxu0 %v359
        %v685 = vpop.f32.mrf.mxu0
        %v686 = vadd.f32 0.0, %v685
        %687 = vmatmul.f32.gmra.mxu0 %v362
        %v688 = vpop.f32.mrf.mxu0
        %v689 = vadd.f32 0.0, %v688
        %690 = vmatmul.f32.gmra.mxu0 %v365
        %v691 = vpop.f32.mrf.mxu0
        %v692 = vadd.f32 0.0, %v691
        %693 = vmatmul.f32.gmra.mxu0 %v368
        %v694 = vpop.f32.mrf.mxu0
        %v695 = vadd.f32 0.0, %v694
        %696 = vmatmul.f32.gmra.mxu0 %v371
        %v697 = vpop.f32.mrf.mxu0
        %v698 = vadd.f32 0.0, %v697
        %699 = vmatmul.f32.gmra.mxu0 %v374
        %v700 = vpop.f32.mrf.mxu0
        %v701 = vadd.f32 0.0, %v700
        %702 = vmatmul.f32.gmra.mxu0 %v377
        %v703 = vpop.f32.mrf.mxu0
        %v704 = vadd.f32 0.0, %v703
        %705 = vmatmul.f32.gmra.mxu0 %v380
        %v706 = vpop.f32.mrf.mxu0
        %v707 = vadd.f32 0.0, %v706
        %708 = vmatmul.f32.gmra.mxu0 %v383
        %v709 = vpop.f32.mrf.mxu0
        %v710 = vadd.f32 0.0, %v709
        %711 = vmatmul.f32.gmra.mxu0 %v386
        %v712 = vpop.f32.mrf.mxu0
        %v713 = vadd.f32 0.0, %v712
        %714 = vmatmul.f32.gmra.mxu0 %v389
        %v715 = vpop.f32.mrf.mxu0
        %v716 = vadd.f32 0.0, %v715
        %717 = vmatmul.f32.gmra.mxu0 %v392
        %v718 = vpop.f32.mrf.mxu0
        %v719 = vadd.f32 0.0, %v718
        %720 = vmatmul.f32.gmra.mxu0 %v395
        %v721 = vpop.f32.mrf.mxu0
        %v722 = vadd.f32 0.0, %v721
        %723 = vmatmul.f32.gmra.mxu0 %v398
        %v724 = vpop.f32.mrf.mxu0
        %v725 = vadd.f32 0.0, %v724
        %726 = vmatmul.f32.gmra.mxu0 %v401
        %v727 = vpop.f32.mrf.mxu0
        %v728 = vadd.f32 0.0, %v727
        %729 = vmatmul.f32.gmra.mxu0 %v404
        %v730 = vpop.f32.mrf.mxu0
        %v731 = vadd.f32 0.0, %v730
        %732 = vmatmul.f32.gmra.mxu0 %v407
        %v733 = vpop.f32.mrf.mxu0
        %v734 = vadd.f32 0.0, %v733
        %735 = vmatmul.f32.gmra.mxu0 %v410
        %v736 = vpop.f32.mrf.mxu0
        %v737 = vadd.f32 0.0, %v736
        %738 = vmatmul.f32.gmra.mxu0 %v413
        %v739 = vpop.f32.mrf.mxu0
        %v740 = vadd.f32 0.0, %v739
        %741 = vmatmul.f32.gmra.mxu0 %v416
        %v742 = vpop.f32.mrf.mxu0
        %v743 = vadd.f32 0.0, %v742
        %744 = vmatmul.f32.gmra.mxu0 %v419
        %v745 = vpop.f32.mrf.mxu0
        %v746 = vadd.f32 0.0, %v745
        %747 = vmatmul.f32.gmra.mxu0 %v422
        %v748 = vpop.f32.mrf.mxu0
        %v749 = vadd.f32 0.0, %v748
        %750 = vmatmul.f32.gmra.mxu0 %v425
        %v751 = vpop.f32.mrf.mxu0
        %v752 = vadd.f32 0.0, %v751
        %753 = vmatmul.f32.gmra.mxu0 %v428
        %v754 = vpop.f32.mrf.mxu0
        %v755 = vadd.f32 0.0, %v754
        %756 = vmatmul.f32.gmra.mxu0 %v431
        %v757 = vpop.f32.mrf.mxu0
        %v758 = vadd.f32 0.0, %v757
        %759 = vmatmul.f32.gmra.mxu0 %v434
        %v760 = vpop.f32.mrf.mxu0
        %v761 = vadd.f32 0.0, %v760
        %762 = vmatmul.f32.gmra.mxu0 %v437
        %v763 = vpop.f32.mrf.mxu0
        %v764 = vadd.f32 0.0, %v763
        %765 = vmatmul.f32.gmra.mxu0 %v440
        %v766 = vpop.f32.mrf.mxu0
        %v767 = vadd.f32 0.0, %v766
        %768 = vmatmul.f32.gmra.mxu0 %v443
        %v769 = vpop.f32.mrf.mxu0
        %v770 = vadd.f32 0.0, %v769
        %771 = vmatmul.f32.gmra.mxu0 %v446
        %v772 = vpop.f32.mrf.mxu0
        %v773 = vadd.f32 0.0, %v772
        %774 = vmatmul.f32.gmra.mxu0 %v449
        %v775 = vpop.f32.mrf.mxu0
        %v776 = vadd.f32 0.0, %v775
        %777 = vmatmul.f32.gmra.mxu0 %v452
        %v778 = vpop.f32.mrf.mxu0
        %v779 = vadd.f32 0.0, %v778
        %780 = vmatmul.f32.gmra.mxu0 %v455
        %v781 = vpop.f32.mrf.mxu0
        %v782 = vadd.f32 0.0, %v781
        %783 = vmatmul.f32.gmra.mxu0 %v458
        %v784 = vpop.f32.mrf.mxu0
        %v785 = vadd.f32 0.0, %v784
        %786 = vmatmul.f32.gmra.mxu0 %v461
        %v787 = vpop.f32.mrf.mxu0
        %v788 = vadd.f32 0.0, %v787
        %789 = vmatmul.f32.gmra.mxu0 %v464
        %v790 = vpop.f32.mrf.mxu0
        %v791 = vadd.f32 0.0, %v790
        %792 = vmatmul.f32.gmra.mxu0 %v467
        %v793 = vpop.f32.mrf.mxu0
        %v794 = vadd.f32 0.0, %v793
        %795 = vmatmul.f32.gmra.mxu0 %v470
        %v796 = vpop.f32.mrf.mxu0
        %v797 = vadd.f32 0.0, %v796
        %798 = vmatmul.f32.gmra.mxu0 %v473
        %v799 = vpop.f32.mrf.mxu0
        %v800 = vadd.f32 0.0, %v799
        %801 = vdwg.mxu0
        %v802 = vmax.f32 %v498, %v501
        %v803 = vmax.f32 %v802, %v504
        %v804 = vmax.f32 %v803, %v507
        %v805 = vrot.slane %v804, 4
        %v806 = vmax.f32 %v804, %v805
        %v807 = vrot.slane %v806, 2
        %v808 = vmax.f32 %v806, %v807
        %v809 = vrot.slane %v808, 1
        %v810 = vmax.f32 %v808, %v809
        %v811 = vmax.f32 %v659, %v662
        %v812 = vmax.f32 %v811, %v665
        %v813 = vmax.f32 %v812, %v668
        %v814 = vrot.slane %v813, 4
        %v815 = vmax.f32 %v813, %v814
        %v816 = vrot.slane %v815, 2
        %v817 = vmax.f32 %v815, %v816
        %v818 = vrot.slane %v817, 1
        %v819 = vmax.f32 %v817, %v818
        %v820 = vmax.f32 %v510, %v513
        %v821 = vmax.f32 %v820, %v516
        %v822 = vmax.f32 %v821, %v519
        %v823 = vrot.slane %v822, 4
        %v824 = vmax.f32 %v822, %v823
        %v825 = vrot.slane %v824, 2
        %v826 = vmax.f32 %v824, %v825
        %v827 = vrot.slane %v826, 1
        %v828 = vmax.f32 %v826, %v827
        %v829 = vmax.f32 %v671, %v674
        %v830 = vmax.f32 %v829, %v677
        %v831 = vmax.f32 %v830, %v680
        %v832 = vrot.slane %v831, 4
        %v833 = vmax.f32 %v831, %v832
        %v834 = vrot.slane %v833, 2
        %v835 = vmax.f32 %v833, %v834
        %v836 = vrot.slane %v835, 1
        %v837 = vmax.f32 %v835, %v836
        %v838 = vmax.f32 %v522, %v525
        %v839 = vmax.f32 %v838, %v528
        %v840 = vmax.f32 %v839, %v531
        %v841 = vrot.slane %v840, 4
        %v842 = vmax.f32 %v840, %v841
        %v843 = vrot.slane %v842, 2
        %v844 = vmax.f32 %v842, %v843
        %v845 = vrot.slane %v844, 1
        %v846 = vmax.f32 %v844, %v845
        %v847 = vmax.f32 %v683, %v686
        %v848 = vmax.f32 %v847, %v689
        %v849 = vmax.f32 %v848, %v692
        %v850 = vrot.slane %v849, 4
        %v851 = vmax.f32 %v849, %v850
        %v852 = vrot.slane %v851, 2
        %v853 = vmax.f32 %v851, %v852
        %v854 = vrot.slane %v853, 1
        %v855 = vmax.f32 %v853, %v854
        %v856 = vmax.f32 %v534, %v537
        %v857 = vmax.f32 %v856, %v540
        %v858 = vmax.f32 %v857, %v543
        %v859 = vrot.slane %v858, 4
        %v860 = vmax.f32 %v858, %v859
        %v861 = vrot.slane %v860, 2
        %v862 = vmax.f32 %v860, %v861
        %v863 = vrot.slane %v862, 1
        %v864 = vmax.f32 %v862, %v863
        %v865 = vmax.f32 %v695, %v698
        %v866 = vmax.f32 %v865, %v701
        %v867 = vmax.f32 %v866, %v704
        %v868 = vrot.slane %v867, 4
        %v869 = vmax.f32 %v867, %v868
        %v870 = vrot.slane %v869, 2
        %v871 = vmax.f32 %v869, %v870
        %v872 = vrot.slane %v871, 1
        %v873 = vmax.f32 %v871, %v872
        %v874 = vsub.f32 %v498, %v810
        %v875 = vsub.f32 %v659, %v819
        %v876 = vsub.f32 %v501, %v810
        %v877 = vsub.f32 %v662, %v819
        %v878 = vsub.f32 %v504, %v810
        %v879 = vsub.f32 %v665, %v819
        %v880 = vsub.f32 %v507, %v810
        %v881 = vsub.f32 %v668, %v819
        %v882 = vsub.f32 %v510, %v828
        %v883 = vsub.f32 %v671, %v837
        %v884 = vsub.f32 %v513, %v828
        %v885 = vsub.f32 %v674, %v837
        %v886 = vsub.f32 %v516, %v828
        %v887 = vsub.f32 %v677, %v837
        %v888 = vsub.f32 %v519, %v828
        %v889 = vsub.f32 %v680, %v837
        %v890 = vsub.f32 %v522, %v846
        %v891 = vsub.f32 %v683, %v855
        %v892 = vsub.f32 %v525, %v846
        %v893 = vsub.f32 %v686, %v855
        %v894 = vsub.f32 %v528, %v846
        %v895 = vsub.f32 %v689, %v855
        %v896 = vsub.f32 %v531, %v846
        %v897 = vsub.f32 %v692, %v855
        %v898 = vsub.f32 %v534, %v864
        %v899 = vsub.f32 %v695, %v873
        %v900 = vsub.f32 %v537, %v864
        %v901 = vsub.f32 %v698, %v873
        %v902 = vsub.f32 %v540, %v864
        %v903 = vsub.f32 %v701, %v873
        %v904 = vsub.f32 %v543, %v864
        %v905 = vsub.f32 %v704, %v873
        %v906 = vmul.f32 %v874, 1.442695
        %v907 = vpow.pop %v906
        %v908 = vmul.f32 %v875, 1.442695
        %v909 = vpow.pop %v908
        %v910 = vmul.f32 %v876, 1.442695
        %v911 = vpow.pop %v910
        %v912 = vmul.f32 %v877, 1.442695
        %v913 = vpow.pop %v912
        %v914 = vmul.f32 %v878, 1.442695
        %v915 = vpow.pop %v914
        %v916 = vmul.f32 %v879, 1.442695
        %v917 = vpow.pop %v916
        %v918 = vmul.f32 %v880, 1.442695
        %v919 = vpow.pop %v918
        %v920 = vmul.f32 %v881, 1.442695
        %v921 = vpow.pop %v920
        %v922 = vmul.f32 %v882, 1.442695
        %v923 = vpow.pop %v922
        %v924 = vmul.f32 %v883, 1.442695
        %v925 = vpow.pop %v924
        %v926 = vmul.f32 %v884, 1.442695
        %v927 = vpow.pop %v926
        %v928 = vmul.f32 %v885, 1.442695
        %v929 = vpow.pop %v928
        %v930 = vmul.f32 %v886, 1.442695
        %v931 = vpow.pop %v930
        %v932 = vmul.f32 %v887, 1.442695
        %v933 = vpow.pop %v932
        %v934 = vmul.f32 %v888, 1.442695
        %v935 = vpow.pop %v934
        %v936 = vmul.f32 %v889, 1.442695
        %v937 = vpow.pop %v936
        %v938 = vmul.f32 %v890, 1.442695
        %v939 = vpow.pop %v938
        %v940 = vmul.f32 %v891, 1.442695
        %v941 = vpow.pop %v940
        %v942 = vmul.f32 %v892, 1.442695
        %v943 = vpow.pop %v942
        %v944 = vmul.f32 %v893, 1.442695
        %v945 = vpow.pop %v944
        %v946 = vmul.f32 %v894, 1.442695
        %v947 = vpow.pop %v946
        %v948 = vmul.f32 %v895, 1.442695
        %v949 = vpow.pop %v948
        %v950 = vmul.f32 %v896, 1.442695
        %v951 = vpow.pop %v950
        %v952 = vmul.f32 %v897, 1.442695
        %v953 = vpow.pop %v952
        %v954 = vmul.f32 %v898, 1.442695
        %v955 = vpow.pop %v954
        %v956 = vmul.f32 %v899, 1.442695
        %v957 = vpow.pop %v956
        %v958 = vmul.f32 %v900, 1.442695
        %v959 = vpow.pop %v958
        %v960 = vmul.f32 %v901, 1.442695
        %v961 = vpow.pop %v960
        %v962 = vmul.f32 %v902, 1.442695
        %v963 = vpow.pop %v962
        %v964 = vmul.f32 %v903, 1.442695
        %v965 = vpow.pop %v964
        %v966 = vmul.f32 %v904, 1.442695
        %v967 = vpow.pop %v966
        %v968 = vmul.f32 %v905, 1.442695
        %v969 = vpow.pop %v968
        %v970 = vadd.f32 %v907, %v911
        %v971 = vadd.f32 %v970, %v915
        %v972 = vadd.f32 %v971, %v919
        %v973 = vrot.slane %v972, 4
        %v974 = vadd.f32 %v972, %v973
        %v975 = vrot.slane %v974, 2
        %v976 = vadd.f32 %v974, %v975
        %v977 = vrot.slane %v976, 1
        %v978 = vadd.f32 %v976, %v977
        %v979 = vadd.f32 %v909, %v913
        %v980 = vadd.f32 %v979, %v917
        %v981 = vadd.f32 %v980, %v921
        %v982 = vrot.slane %v981, 4
        %v983 = vadd.f32 %v981, %v982
        %v984 = vrot.slane %v983, 2
        %v985 = vadd.f32 %v983, %v984
        %v986 = vrot.slane %v985, 1
        %v987 = vadd.f32 %v985, %v986
        %v988 = vadd.f32 %v923, %v927
        %v989 = vadd.f32 %v988, %v931
        %v990 = vadd.f32 %v989, %v935
        %v991 = vrot.slane %v990, 4
        %v992 = vadd.f32 %v990, %v991
        %v993 = vrot.slane %v992, 2
        %v994 = vadd.f32 %v992, %v993
        %v995 = vrot.slane %v994, 1
        %v996 = vadd.f32 %v994, %v995
        %v997 = vadd.f32 %v925, %v929
        %v998 = vadd.f32 %v997, %v933
        %v999 = vadd.f32 %v998, %v937
        %v1000 = vrot.slane %v999, 4
        %v1001 = vadd.f32 %v999, %v1000
        %v1002 = vrot.slane %v1001, 2
        %v1003 = vadd.f32 %v1001, %v1002
        %v1004 = vrot.slane %v1003, 1
        %v1005 = vadd.f32 %v1003, %v1004
        %v1006 = vadd.f32 %v939, %v943
        %v1007 = vadd.f32 %v1006, %v947
        %v1008 = vadd.f32 %v1007, %v951
        %v1009 = vrot.slane %v1008, 4
        %v1010 = vadd.f32 %v1008, %v1009
        %v1011 = vrot.slane %v1010, 2
        %v1012 = vadd.f32 %v1010, %v1011
        %v1013 = vrot.slane %v1012, 1
        %v1014 = vadd.f32 %v1012, %v1013
        %v1015 = vadd.f32 %v941, %v945
        %v1016 = vadd.f32 %v1015, %v949
        %v1017 = vadd.f32 %v1016, %v953
        %v1018 = vrot.slane %v1017, 4
        %v1019 = vadd.f32 %v1017, %v1018
        %v1020 = vrot.slane %v1019, 2
        %v1021 = vadd.f32 %v1019, %v1020
        %v1022 = vrot.slane %v1021, 1
        %v1023 = vadd.f32 %v1021, %v1022
        %v1024 = vadd.f32 %v955, %v959
        %v1025 = vadd.f32 %v1024, %v963
        %v1026 = vadd.f32 %v1025, %v967
        %v1027 = vrot.slane %v1026, 4
        %v1028 = vadd.f32 %v1026, %v1027
        %v1029 = vrot.slane %v1028, 2
        %v1030 = vadd.f32 %v1028, %v1029
        %v1031 = vrot.slane %v1030, 1
        %v1032 = vadd.f32 %v1030, %v1031
        %v1033 = vadd.f32 %v957, %v961
        %v1034 = vadd.f32 %v1033, %v965
        %v1035 = vadd.f32 %v1034, %v969
        %v1036 = vrot.slane %v1035, 4
        %v1037 = vadd.f32 %v1035, %v1036
        %v1038 = vrot.slane %v1037, 2
        %v1039 = vadd.f32 %v1037, %v1038
        %v1040 = vrot.slane %v1039, 1
        %v1041 = vadd.f32 %v1039, %v1040
        %v1042 = vrcp.pop %v978
        %v1043 = vrcp.pop %v987
        %v1044 = vrcp.pop %v996
        %v1045 = vrcp.pop %v1005
        %v1046 = vrcp.pop %v1014
        %v1047 = vrcp.pop %v1023
        %v1048 = vrcp.pop %v1032
        %v1049 = vrcp.pop %v1041
        %v1050 = vmul.f32 %v907, %v1042
        %v1051 = vmul.f32 %v909, %v1043
        %v1052 = vmul.f32 %v911, %v1042
        %v1053 = vmul.f32 %v913, %v1043
        %v1054 = vmul.f32 %v915, %v1042
        %v1055 = vmul.f32 %v917, %v1043
        %v1056 = vmul.f32 %v919, %v1042
        %v1057 = vmul.f32 %v921, %v1043
        %v1058 = vmul.f32 %v923, %v1044
        %v1059 = vmul.f32 %v925, %v1045
        %v1060 = vmul.f32 %v927, %v1044
        %v1061 = vmul.f32 %v929, %v1045
        %v1062 = vmul.f32 %v931, %v1044
        %v1063 = vmul.f32 %v933, %v1045
        %v1064 = vmul.f32 %v935, %v1044
        %v1065 = vmul.f32 %v937, %v1045
        %v1066 = vmul.f32 %v939, %v1046
        %v1067 = vmul.f32 %v941, %v1047
        %v1068 = vmul.f32 %v943, %v1046
        %v1069 = vmul.f32 %v945, %v1047
        %v1070 = vmul.f32 %v947, %v1046
        %v1071 = vmul.f32 %v949, %v1047
        %v1072 = vmul.f32 %v951, %v1046
        %v1073 = vmul.f32 %v953, %v1047
        %v1074 = vmul.f32 %v955, %v1048
        %v1075 = vmul.f32 %v957, %v1049
        %v1076 = vmul.f32 %v959, %v1048
        %v1077 = vmul.f32 %v961, %v1049
        %v1078 = vmul.f32 %v963, %v1048
        %v1079 = vmul.f32 %v965, %v1049
        %v1080 = vmul.f32 %v967, %v1048
        %v1081 = vmul.f32 %v969, %v1049
        %v1082 = vmax.f32 %v546, %v707
        %1083 = vmax.xlane.f32.xlu0 %v1082
        %v1084 = vpop.xlane.xlu0 %1083
        %v1085 = vmax.f32 %v549, %v710
        %1086 = vmax.xlane.f32.xlu0 %v1085
        %v1087 = vpop.xlane.xlu0 %1086
        %v1088 = vmax.f32 %v552, %v713
        %1089 = vmax.xlane.f32.xlu0 %v1088
        %v1090 = vpop.xlane.xlu0 %1089
        %v1091 = vmax.f32 %v555, %v716
        %1092 = vmax.xlane.f32.xlu0 %v1091
        %v1093 = vpop.xlane.xlu0 %1092
        %v1094 = vmax.f32 %v558, %v719
        %1095 = vmax.xlane.f32.xlu0 %v1094
        %v1096 = vpop.xlane.xlu0 %1095
        %v1097 = vmax.f32 %v561, %v722
        %1098 = vmax.xlane.f32.xlu0 %v1097
        %v1099 = vpop.xlane.xlu0 %1098
        %v1100 = vmax.f32 %v564, %v725
        %1101 = vmax.xlane.f32.xlu0 %v1100
        %v1102 = vpop.xlane.xlu0 %1101
        %v1103 = vmax.f32 %v567, %v728
        %1104 = vmax.xlane.f32.xlu0 %v1103
        %v1105 = vpop.xlane.xlu0 %1104
        %v1106 = vmax.f32 %v570, %v731
        %1107 = vmax.xlane.f32.xlu0 %v1106
        %v1108 = vpop.xlane.xlu0 %1107
        %v1109 = vmax.f32 %v573, %v734
        %1110 = vmax.xlane.f32.xlu0 %v1109
        %v1111 = vpop.xlane.xlu0 %1110
        %v1112 = vmax.f32 %v576, %v737
        %1113 = vmax.xlane.f32.xlu0 %v1112
        %v1114 = vpop.xlane.xlu0 %1113
        %v1115 = vmax.f32 %v579, %v740
        %1116 = vmax.xlane.f32.xlu0 %v1115
        %v1117 = vpop.xlane.xlu0 %1116
        %v1118 = vmax.f32 %v582, %v743
        %1119 = vmax.xlane.f32.xlu0 %v1118
        %v1120 = vpop.xlane.xlu0 %1119
        %v1121 = vmax.f32 %v585, %v746
        %1122 = vmax.xlane.f32.xlu0 %v1121
        %v1123 = vpop.xlane.xlu0 %1122
        %v1124 = vmax.f32 %v588, %v749
        %1125 = vmax.xlane.f32.xlu0 %v1124
        %v1126 = vpop.xlane.xlu0 %1125
        %v1127 = vmax.f32 %v591, %v752
        %1128 = vmax.xlane.f32.xlu0 %v1127
        %v1129 = vpop.xlane.xlu0 %1128
        %v1130 = vsub.f32 %v546, %v1084
        %v1131 = vsub.f32 %v707, %v1084
        %v1132 = vsub.f32 %v549, %v1087
        %v1133 = vsub.f32 %v710, %v1087
        %v1134 = vsub.f32 %v552, %v1090
        %v1135 = vsub.f32 %v713, %v1090
        %v1136 = vsub.f32 %v555, %v1093
        %v1137 = vsub.f32 %v716, %v1093
        %v1138 = vsub.f32 %v558, %v1096
        %v1139 = vsub.f32 %v719, %v1096
        %v1140 = vsub.f32 %v561, %v1099
        %v1141 = vsub.f32 %v722, %v1099
        %v1142 = vsub.f32 %v564, %v1102
        %v1143 = vsub.f32 %v725, %v1102
        %v1144 = vsub.f32 %v567, %v1105
        %v1145 = vsub.f32 %v728, %v1105
        %v1146 = vsub.f32 %v570, %v1108
        %v1147 = vsub.f32 %v731, %v1108
        %v1148 = vsub.f32 %v573, %v1111
        %v1149 = vsub.f32 %v734, %v1111
        %v1150 = vsub.f32 %v576, %v1114
        %v1151 = vsub.f32 %v737, %v1114
        %v1152 = vsub.f32 %v579, %v1117
        %v1153 = vsub.f32 %v740, %v1117
        %v1154 = vsub.f32 %v582, %v1120
        %v1155 = vsub.f32 %v743, %v1120
        %v1156 = vsub.f32 %v585, %v1123
        %v1157 = vsub.f32 %v746, %v1123
        %v1158 = vsub.f32 %v588, %v1126
        %v1159 = vsub.f32 %v749, %v1126
        %v1160 = vsub.f32 %v591, %v1129
        %v1161 = vsub.f32 %v752, %v1129
        %v1162 = vmul.f32 %v1130, 1.442695
        %v1163 = vpow.pop %v1162
        %v1164 = vmul.f32 %v1131, 1.442695
        %v1165 = vpow.pop %v1164
        %v1166 = vmul.f32 %v1132, 1.442695
        %v1167 = vpow.pop %v1166
        %v1168 = vmul.f32 %v1133, 1.442695
        %v1169 = vpow.pop %v1168
        %v1170 = vmul.f32 %v1134, 1.442695
        %v1171 = vpow.pop %v1170
        %v1172 = vmul.f32 %v1135, 1.442695
        %v1173 = vpow.pop %v1172
        %v1174 = vmul.f32 %v1136, 1.442695
        %v1175 = vpow.pop %v1174
        %v1176 = vmul.f32 %v1137, 1.442695
        %v1177 = vpow.pop %v1176
        %v1178 = vmul.f32 %v1138, 1.442695
        %v1179 = vpow.pop %v1178
        %v1180 = vmul.f32 %v1139, 1.442695
        %v1181 = vpow.pop %v1180
        %v1182 = vmul.f32 %v1140, 1.442695
        %v1183 = vpow.pop %v1182
        %v1184 = vmul.f32 %v1141, 1.442695
        %v1185 = vpow.pop %v1184
        %v1186 = vmul.f32 %v1142, 1.442695
        %v1187 = vpow.pop %v1186
        %v1188 = vmul.f32 %v1143, 1.442695
        %v1189 = vpow.pop %v1188
        %v1190 = vmul.f32 %v1144, 1.442695
        %v1191 = vpow.pop %v1190
        %v1192 = vmul.f32 %v1145, 1.442695
        %v1193 = vpow.pop %v1192
        %v1194 = vmul.f32 %v1146, 1.442695
        %v1195 = vpow.pop %v1194
        %v1196 = vmul.f32 %v1147, 1.442695
        %v1197 = vpow.pop %v1196
        %v1198 = vmul.f32 %v1148, 1.442695
        %v1199 = vpow.pop %v1198
        %v1200 = vmul.f32 %v1149, 1.442695
        %v1201 = vpow.pop %v1200
        %v1202 = vmul.f32 %v1150, 1.442695
        %v1203 = vpow.pop %v1202
        %v1204 = vmul.f32 %v1151, 1.442695
        %v1205 = vpow.pop %v1204
        %v1206 = vmul.f32 %v1152, 1.442695
        %v1207 = vpow.pop %v1206
        %v1208 = vmul.f32 %v1153, 1.442695
        %v1209 = vpow.pop %v1208
        %v1210 = vmul.f32 %v1154, 1.442695
        %v1211 = vpow.pop %v1210
        %v1212 = vmul.f32 %v1155, 1.442695
        %v1213 = vpow.pop %v1212
        %v1214 = vmul.f32 %v1156, 1.442695
        %v1215 = vpow.pop %v1214
        %v1216 = vmul.f32 %v1157, 1.442695
        %v1217 = vpow.pop %v1216
        %v1218 = vmul.f32 %v1158, 1.442695
        %v1219 = vpow.pop %v1218
        %v1220 = vmul.f32 %v1159, 1.442695
        %v1221 = vpow.pop %v1220
        %v1222 = vmul.f32 %v1160, 1.442695
        %v1223 = vpow.pop %v1222
        %v1224 = vmul.f32 %v1161, 1.442695
        %v1225 = vpow.pop %v1224
        %v1226 = vadd.f32 %v1163, %v1165
        %1227 = vadd.xlane.f32.xlu0 %v1226
        %v1228 = vpop.xlane.xlu0 %1227
        %v1229 = vadd.f32 %v1167, %v1169
        %1230 = vadd.xlane.f32.xlu0 %v1229
        %v1231 = vpop.xlane.xlu0 %1230
        %v1232 = vadd.f32 %v1171, %v1173
        %1233 = vadd.xlane.f32.xlu0 %v1232
        %v1234 = vpop.xlane.xlu0 %1233
        %v1235 = vadd.f32 %v1175, %v1177
        %1236 = vadd.xlane.f32.xlu0 %v1235
        %v1237 = vpop.xlane.xlu0 %1236
        %v1238 = vadd.f32 %v1179, %v1181
        %1239 = vadd.xlane.f32.xlu0 %v1238
        %v1240 = vpop.xlane.xlu0 %1239
        %v1241 = vadd.f32 %v1183, %v1185
        %1242 = vadd.xlane.f32.xlu0 %v1241
        %v1243 = vpop.xlane.xlu0 %1242
        %v1244 = vadd.f32 %v1187, %v1189
        %1245 = vadd.xlane.f32.xlu0 %v1244
        %v1246 = vpop.xlane.xlu0 %1245
        %v1247 = vadd.f32 %v1191, %v1193
        %1248 = vadd.xlane.f32.xlu0 %v1247
        %v1249 = vpop.xlane.xlu0 %1248
        %v1250 = vadd.f32 %v1195, %v1197
        %1251 = vadd.xlane.f32.xlu0 %v1250
        %v1252 = vpop.xlane.xlu0 %1251
        %v1253 = vadd.f32 %v1199, %v1201
        %1254 = vadd.xlane.f32.xlu0 %v1253
        %v1255 = vpop.xlane.xlu0 %1254
        %v1256 = vadd.f32 %v1203, %v1205
        %1257 = vadd.xlane.f32.xlu0 %v1256
        %v1258 = vpop.xlane.xlu0 %1257
        %v1259 = vadd.f32 %v1207, %v1209
        %1260 = vadd.xlane.f32.xlu0 %v1259
        %v1261 = vpop.xlane.xlu0 %1260
        %v1262 = vadd.f32 %v1211, %v1213
        %1263 = vadd.xlane.f32.xlu0 %v1262
        %v1264 = vpop.xlane.xlu0 %1263
        %v1265 = vadd.f32 %v1215, %v1217
        %1266 = vadd.xlane.f32.xlu0 %v1265
        %v1267 = vpop.xlane.xlu0 %1266
        %v1268 = vadd.f32 %v1219, %v1221
        %1269 = vadd.xlane.f32.xlu0 %v1268
        %v1270 = vpop.xlane.xlu0 %1269
        %v1271 = vadd.f32 %v1223, %v1225
        %1272 = vadd.xlane.f32.xlu0 %v1271
        %v1273 = vpop.xlane.xlu0 %1272
        %1274 = vmatpush.xpose.msra.mxu0 %v639
        %1275 = vmatpush.xpose.msra.mxu0 %v636
        %1276 = vmatpush.xpose.msra.mxu0 %v633
        %1277 = vmatpush.xpose.msra.mxu0 %v630
        %1278 = vmatpush.xpose.msra.mxu0 %v627
        %1279 = vmatpush.xpose.msra.mxu0 %v624
        %1280 = vmatpush.xpose.msra.mxu0 %v621
        %1281 = vmatpush.xpose.msra.mxu0 %v618
        %1282 = vmatpush.xpose.msra.mxu0 %v615
        %1283 = vmatpush.xpose.msra.mxu0 %v612
        %1284 = vmatpush.xpose.msra.mxu0 %v609
        %1285 = vmatpush.xpose.msra.mxu0 %v606
        %1286 = vmatpush.xpose.msra.mxu0 %v603
        %1287 = vmatpush.xpose.msra.mxu0 %v600
        %1288 = vmatpush.xpose.msra.mxu0 %v597
        %1289 = vmatpush.xpose.msra.mxu0 %v594
        %1290 = vmatmul.f32.gmra.mxu0 %v1163
        %v1291 = vpop.f32.mrf.mxu0
        %v1292 = vadd.f32 0.0, %v1291
        %1293 = vmatmul.f32.gmra.mxu0 %v1167
        %v1294 = vpop.f32.mrf.mxu0
        %v1295 = vadd.f32 0.0, %v1294
        %1296 = vmatmul.f32.gmra.mxu0 %v1171
        %v1297 = vpop.f32.mrf.mxu0
        %v1298 = vadd.f32 0.0, %v1297
        %1299 = vmatmul.f32.gmra.mxu0 %v1175
        %v1300 = vpop.f32.mrf.mxu0
        %v1301 = vadd.f32 0.0, %v1300
        %1302 = vmatmul.f32.gmra.mxu0 %v1179
        %v1303 = vpop.f32.mrf.mxu0
        %v1304 = vadd.f32 0.0, %v1303
        %1305 = vmatmul.f32.gmra.mxu0 %v1183
        %v1306 = vpop.f32.mrf.mxu0
        %v1307 = vadd.f32 0.0, %v1306
        %1308 = vmatmul.f32.gmra.mxu0 %v1187
        %v1309 = vpop.f32.mrf.mxu0
        %v1310 = vadd.f32 0.0, %v1309
        %1311 = vmatmul.f32.gmra.mxu0 %v1191
        %v1312 = vpop.f32.mrf.mxu0
        %v1313 = vadd.f32 0.0, %v1312
        %1314 = vmatmul.f32.gmra.mxu0 %v1195
        %v1315 = vpop.f32.mrf.mxu0
        %v1316 = vadd.f32 0.0, %v1315
        %1317 = vmatmul.f32.gmra.mxu0 %v1199
        %v1318 = vpop.f32.mrf.mxu0
        %v1319 = vadd.f32 0.0, %v1318
        %1320 = vmatmul.f32.gmra.mxu0 %v1203
        %v1321 = vpop.f32.mrf.mxu0
        %v1322 = vadd.f32 0.0, %v1321
        %1323 = vmatmul.f32.gmra.mxu0 %v1207
        %v1324 = vpop.f32.mrf.mxu0
        %v1325 = vadd.f32 0.0, %v1324
        %1326 = vmatmul.f32.gmra.mxu0 %v1211
        %v1327 = vpop.f32.mrf.mxu0
        %v1328 = vadd.f32 0.0, %v1327
        %1329 = vmatmul.f32.gmra.mxu0 %v1215
        %v1330 = vpop.f32.mrf.mxu0
        %v1331 = vadd.f32 0.0, %v1330
        %1332 = vmatmul.f32.gmra.mxu0 %v1219
        %v1333 = vpop.f32.mrf.mxu0
        %v1334 = vadd.f32 0.0, %v1333
        %1335 = vmatmul.f32.gmra.mxu0 %v1223
        %v1336 = vpop.f32.mrf.mxu0
        %v1337 = vadd.f32 0.0, %v1336
        %1338 = vdwg.mxu0
        %1339 = vmatpush.xpose.msra.mxu0 %v800
        %1340 = vmatpush.xpose.msra.mxu0 %v797
        %1341 = vmatpush.xpose.msra.mxu0 %v794
        %1342 = vmatpush.xpose.msra.mxu0 %v791
        %1343 = vmatpush.xpose.msra.mxu0 %v788
        %1344 = vmatpush.xpose.msra.mxu0 %v785
        %1345 = vmatpush.xpose.msra.mxu0 %v782
        %1346 = vmatpush.xpose.msra.mxu0 %v779
        %1347 = vmatpush.xpose.msra.mxu0 %v776
        %1348 = vmatpush.xpose.msra.mxu0 %v773
        %1349 = vmatpush.xpose.msra.mxu0 %v770
        %1350 = vmatpush.xpose.msra.mxu0 %v767
        %1351 = vmatpush.xpose.msra.mxu0 %v764
        %1352 = vmatpush.xpose.msra.mxu0 %v761
        %1353 = vmatpush.xpose.msra.mxu0 %v758
        %1354 = vmatpush.xpose.msra.mxu0 %v755
        %1355 = vmatmul.f32.gmra.mxu0 %v1165
        %v1356 = vpop.f32.mrf.mxu0
        %v1357 = vadd.f32 %v1292, %v1356
        %1358 = vmatmul.f32.gmra.mxu0 %v1169
        %v1359 = vpop.f32.mrf.mxu0
        %v1360 = vadd.f32 %v1295, %v1359
        %1361 = vmatmul.f32.gmra.mxu0 %v1173
        %v1362 = vpop.f32.mrf.mxu0
        %v1363 = vadd.f32 %v1298, %v1362
        %1364 = vmatmul.f32.gmra.mxu0 %v1177
        %v1365 = vpop.f32.mrf.mxu0
        %v1366 = vadd.f32 %v1301, %v1365
        %1367 = vmatmul.f32.gmra.mxu0 %v1181
        %v1368 = vpop.f32.mrf.mxu0
        %v1369 = vadd.f32 %v1304, %v1368
        %1370 = vmatmul.f32.gmra.mxu0 %v1185
        %v1371 = vpop.f32.mrf.mxu0
        %v1372 = vadd.f32 %v1307, %v1371
        %1373 = vmatmul.f32.gmra.mxu0 %v1189
        %v1374 = vpop.f32.mrf.mxu0
        %v1375 = vadd.f32 %v1310, %v1374
        %1376 = vmatmul.f32.gmra.mxu0 %v1193
        %v1377 = vpop.f32.mrf.mxu0
        %v1378 = vadd.f32 %v1313, %v1377
        %1379 = vmatmul.f32.gmra.mxu0 %v1197
        %v1380 = vpop.f32.mrf.mxu0
        %v1381 = vadd.f32 %v1316, %v1380
        %1382 = vmatmul.f32.gmra.mxu0 %v1201
        %v1383 = vpop.f32.mrf.mxu0
        %v1384 = vadd.f32 %v1319, %v1383
        %1385 = vmatmul.f32.gmra.mxu0 %v1205
        %v1386 = vpop.f32.mrf.mxu0
        %v1387 = vadd.f32 %v1322, %v1386
        %1388 = vmatmul.f32.gmra.mxu0 %v1209
        %v1389 = vpop.f32.mrf.mxu0
        %v1390 = vadd.f32 %v1325, %v1389
        %1391 = vmatmul.f32.gmra.mxu0 %v1213
        %v1392 = vpop.f32.mrf.mxu0
        %v1393 = vadd.f32 %v1328, %v1392
        %1394 = vmatmul.f32.gmra.mxu0 %v1217
        %v1395 = vpop.f32.mrf.mxu0
        %v1396 = vadd.f32 %v1331, %v1395
        %1397 = vmatmul.f32.gmra.mxu0 %v1221
        %v1398 = vpop.f32.mrf.mxu0
        %v1399 = vadd.f32 %v1334, %v1398
        %1400 = vmatmul.f32.gmra.mxu0 %v1225
        %v1401 = vpop.f32.mrf.mxu0
        %v1402 = vadd.f32 %v1337, %v1401
        %1403 = vdwg.mxu0
        %v1404 = vld [vmem:[%s6] sm:$0xff]
        %v1405 = vld [vmem:[%s6 + $0x8] sm:$0xff]
        %v1406 = vld [vmem:[%s6 + $0x10] sm:$0xff]
        %v1407 = vld [vmem:[%s6 + $0x18] sm:$0xff]
        %v1408 = vld [vmem:[%s6 + $0x20] sm:$0xff]
        %v1409 = vld [vmem:[%s6 + $0x28] sm:$0xff]
        %v1410 = vld [vmem:[%s6 + $0x30] sm:$0xff]
        %v1411 = vld [vmem:[%s6 + $0x38] sm:$0xff]
        %v1412 = vld [vmem:[%s6 + $0x40] sm:$0xff]
        %v1413 = vld [vmem:[%s6 + $0x48] sm:$0xff]
        %v1414 = vld [vmem:[%s6 + $0x50] sm:$0xff]
        %v1415 = vld [vmem:[%s6 + $0x58] sm:$0xff]
        %v1416 = vld [vmem:[%s6 + $0x60] sm:$0xff]
        %v1417 = vld [vmem:[%s6 + $0x68] sm:$0xff]
        %v1418 = vld [vmem:[%s6 + $0x70] sm:$0xff]
        %v1419 = vld [vmem:[%s6 + $0x78] sm:$0xff]
        %v1420 = vmul.f32 %v1357, %v1404
        %v1421 = vmul.f32 %v1360, %v1405
        %v1422 = vmul.f32 %v1363, %v1406
        %v1423 = vmul.f32 %v1366, %v1407
        %v1424 = vmul.f32 %v1369, %v1408
        %v1425 = vmul.f32 %v1372, %v1409
        %v1426 = vmul.f32 %v1375, %v1410
        %v1427 = vmul.f32 %v1378, %v1411
        %v1428 = vmul.f32 %v1381, %v1412
        %v1429 = vmul.f32 %v1384, %v1413
        %v1430 = vmul.f32 %v1387, %v1414
        %v1431 = vmul.f32 %v1390, %v1415
        %v1432 = vmul.f32 %v1393, %v1416
        %v1433 = vmul.f32 %v1396, %v1417
        %v1434 = vmul.f32 %v1399, %v1418
        %v1435 = vmul.f32 %v1402, %v1419
        %v1436 = vrcp.pop %v1228
        %v1437 = vrcp.pop %v1231
        %v1438 = vrcp.pop %v1234
        %v1439 = vrcp.pop %v1237
        %v1440 = vrcp.pop %v1240
        %v1441 = vrcp.pop %v1243
        %v1442 = vrcp.pop %v1246
        %v1443 = vrcp.pop %v1249
        %v1444 = vrcp.pop %v1252
        %v1445 = vrcp.pop %v1255
        %v1446 = vrcp.pop %v1258
        %v1447 = vrcp.pop %v1261
        %v1448 = vrcp.pop %v1264
        %v1449 = vrcp.pop %v1267
        %v1450 = vrcp.pop %v1270
        %v1451 = vrcp.pop %v1273
        %v1452 = vmul.f32 %v1420, %v1436
        %v1453 = vmul.f32 %v1421, %v1437
        %v1454 = vmul.f32 %v1422, %v1438
        %v1455 = vmul.f32 %v1423, %v1439
        %v1456 = vmul.f32 %v1424, %v1440
        %v1457 = vmul.f32 %v1425, %v1441
        %v1458 = vmul.f32 %v1426, %v1442
        %v1459 = vmul.f32 %v1427, %v1443
        %v1460 = vmul.f32 %v1428, %v1444
        %v1461 = vmul.f32 %v1429, %v1445
        %v1462 = vmul.f32 %v1430, %v1446
        %v1463 = vmul.f32 %v1431, %v1447
        %v1464 = vmul.f32 %v1432, %v1448
        %v1465 = vmul.f32 %v1433, %v1449
        %v1466 = vmul.f32 %v1434, %v1450
        %v1467 = vmul.f32 %v1435, %v1451
        %1468 = vxpose.xlu0.b32.start [1/16] %v1452, 128
        %1469 = vxpose.xlu0.b32.cont [2/16] %v1453, 128
        %1470 = vxpose.xlu0.b32.cont [3/16] %v1454, 128
        %1471 = vxpose.xlu0.b32.cont [4/16] %v1455, 128
        %1472 = vxpose.xlu0.b32.cont [5/16] %v1456, 128
        %1473 = vxpose.xlu0.b32.cont [6/16] %v1457, 128
        %1474 = vxpose.xlu0.b32.cont [7/16] %v1458, 128
        %1475 = vxpose.xlu0.b32.cont [8/16] %v1459, 128
        %1476 = vxpose.xlu0.b32.cont [9/16] %v1460, 128
        %1477 = vxpose.xlu0.b32.cont [10/16] %v1461, 128
        %1478 = vxpose.xlu0.b32.cont [11/16] %v1462, 128
        %1479 = vxpose.xlu0.b32.cont [12/16] %v1463, 128
        %1480 = vxpose.xlu0.b32.cont [13/16] %v1464, 128
        %1481 = vxpose.xlu0.b32.cont [14/16] %v1465, 128
        %1482 = vxpose.xlu0.b32.cont [15/16] %v1466, 128
        %1483 = vxpose.xlu0.b32.end [16/16] %v1467, 128
        %v1484 = vpop.trf.xlu0
        %v1485 = vpop.trf.xlu0
        %v1486 = vpop.trf.xlu0
        %v1487 = vpop.trf.xlu0
        %v1488 = vpop.trf.xlu0
        %v1489 = vpop.trf.xlu0
        %v1490 = vpop.trf.xlu0
        %v1491 = vpop.trf.xlu0
        %v1492 = vpop.trf.xlu0
        %v1493 = vpop.trf.xlu0
        %v1494 = vpop.trf.xlu0
        %v1495 = vpop.trf.xlu0
        %v1496 = vpop.trf.xlu0
        %v1497 = vpop.trf.xlu0
        %v1498 = vpop.trf.xlu0
        %v1499 = vpop.trf.xlu0
        %1500 = vmatpush.msra.mxu0 %v1080
        %1501 = vmatpush.msra.mxu0 %v1078
        %1502 = vmatpush.msra.mxu0 %v1076
        %1503 = vmatpush.msra.mxu0 %v1074
        %1504 = vmatpush.msra.mxu0 %v1072
        %1505 = vmatpush.msra.mxu0 %v1070
        %1506 = vmatpush.msra.mxu0 %v1068
        %1507 = vmatpush.msra.mxu0 %v1066
        %1508 = vmatpush.msra.mxu0 %v1064
        %1509 = vmatpush.msra.mxu0 %v1062
        %1510 = vmatpush.msra.mxu0 %v1060
        %1511 = vmatpush.msra.mxu0 %v1058
        %1512 = vmatpush.msra.mxu0 %v1056
        %1513 = vmatpush.msra.mxu0 %v1054
        %1514 = vmatpush.msra.mxu0 %v1052
        %1515 = vmatpush.msra.mxu0 %v1050
        %1516 = vmatmul.f32.gmra.mxu0 %v1484
        %v1517 = vpop.f32.mrf.mxu0
        %v1518 = vadd.f32 0.0, %v1517
        %1519 = vmatmul.f32.gmra.mxu0 %v1485
        %v1520 = vpop.f32.mrf.mxu0
        %v1521 = vadd.f32 0.0, %v1520
        %1522 = vmatmul.f32.gmra.mxu0 %v1486
        %v1523 = vpop.f32.mrf.mxu0
        %v1524 = vadd.f32 0.0, %v1523
        %1525 = vmatmul.f32.gmra.mxu0 %v1487
        %v1526 = vpop.f32.mrf.mxu0
        %v1527 = vadd.f32 0.0, %v1526
        %1528 = vmatmul.f32.gmra.mxu0 %v1488
        %v1529 = vpop.f32.mrf.mxu0
        %v1530 = vadd.f32 0.0, %v1529
        %1531 = vmatmul.f32.gmra.mxu0 %v1489
        %v1532 = vpop.f32.mrf.mxu0
        %v1533 = vadd.f32 0.0, %v1532
        %1534 = vmatmul.f32.gmra.mxu0 %v1490
        %v1535 = vpop.f32.mrf.mxu0
        %v1536 = vadd.f32 0.0, %v1535
        %1537 = vmatmul.f32.gmra.mxu0 %v1491
        %v1538 = vpop.f32.mrf.mxu0
        %v1539 = vadd.f32 0.0, %v1538
        %1540 = vmatmul.f32.gmra.mxu0 %v1492
        %v1541 = vpop.f32.mrf.mxu0
        %v1542 = vadd.f32 0.0, %v1541
        %1543 = vmatmul.f32.gmra.mxu0 %v1493
        %v1544 = vpop.f32.mrf.mxu0
        %v1545 = vadd.f32 0.0, %v1544
        %1546 = vmatmul.f32.gmra.mxu0 %v1494
        %v1547 = vpop.f32.mrf.mxu0
        %v1548 = vadd.f32 0.0, %v1547
        %1549 = vmatmul.f32.gmra.mxu0 %v1495
        %v1550 = vpop.f32.mrf.mxu0
        %v1551 = vadd.f32 0.0, %v1550
        %1552 = vmatmul.f32.gmra.mxu0 %v1496
        %v1553 = vpop.f32.mrf.mxu0
        %v1554 = vadd.f32 0.0, %v1553
        %1555 = vmatmul.f32.gmra.mxu0 %v1497
        %v1556 = vpop.f32.mrf.mxu0
        %v1557 = vadd.f32 0.0, %v1556
        %1558 = vmatmul.f32.gmra.mxu0 %v1498
        %v1559 = vpop.f32.mrf.mxu0
        %v1560 = vadd.f32 0.0, %v1559
        %1561 = vmatmul.f32.gmra.mxu0 %v1499
        %v1562 = vpop.f32.mrf.mxu0
        %v1563 = vadd.f32 0.0, %v1562
        %1564 = vdwg.mxu0
        %1565 = vmatpush.msra.mxu0 %v1081
        %1566 = vmatpush.msra.mxu0 %v1079
        %1567 = vmatpush.msra.mxu0 %v1077
        %1568 = vmatpush.msra.mxu0 %v1075
        %1569 = vmatpush.msra.mxu0 %v1073
        %1570 = vmatpush.msra.mxu0 %v1071
        %1571 = vmatpush.msra.mxu0 %v1069
        %1572 = vmatpush.msra.mxu0 %v1067
        %1573 = vmatpush.msra.mxu0 %v1065
        %1574 = vmatpush.msra.mxu0 %v1063
        %1575 = vmatpush.msra.mxu0 %v1061
        %1576 = vmatpush.msra.mxu0 %v1059
        %1577 = vmatpush.msra.mxu0 %v1057
        %1578 = vmatpush.msra.mxu0 %v1055
        %1579 = vmatpush.msra.mxu0 %v1053
        %1580 = vmatpush.msra.mxu0 %v1051
        %1581 = vmatmul.f32.gmra.mxu0 %v1484
        %v1582 = vpop.f32.mrf.mxu0
        %v1583 = vadd.f32 0.0, %v1582
        %1584 = vmatmul.f32.gmra.mxu0 %v1485
        %v1585 = vpop.f32.mrf.mxu0
        %v1586 = vadd.f32 0.0, %v1585
        %1587 = vmatmul.f32.gmra.mxu0 %v1486
        %v1588 = vpop.f32.mrf.mxu0
        %v1589 = vadd.f32 0.0, %v1588
        %1590 = vmatmul.f32.gmra.mxu0 %v1487
        %v1591 = vpop.f32.mrf.mxu0
        %v1592 = vadd.f32 0.0, %v1591
        %1593 = vmatmul.f32.gmra.mxu0 %v1488
        %v1594 = vpop.f32.mrf.mxu0
        %v1595 = vadd.f32 0.0, %v1594
        %1596 = vmatmul.f32.gmra.mxu0 %v1489
        %v1597 = vpop.f32.mrf.mxu0
        %v1598 = vadd.f32 0.0, %v1597
        %1599 = vmatmul.f32.gmra.mxu0 %v1490
        %v1600 = vpop.f32.mrf.mxu0
        %v1601 = vadd.f32 0.0, %v1600
        %1602 = vmatmul.f32.gmra.mxu0 %v1491
        %v1603 = vpop.f32.mrf.mxu0
        %v1604 = vadd.f32 0.0, %v1603
        %1605 = vmatmul.f32.gmra.mxu0 %v1492
        %v1606 = vpop.f32.mrf.mxu0
        %v1607 = vadd.f32 0.0, %v1606
        %1608 = vmatmul.f32.gmra.mxu0 %v1493
        %v1609 = vpop.f32.mrf.mxu0
        %v1610 = vadd.f32 0.0, %v1609
        %1611 = vmatmul.f32.gmra.mxu0 %v1494
        %v1612 = vpop.f32.mrf.mxu0
        %v1613 = vadd.f32 0.0, %v1612
        %1614 = vmatmul.f32.gmra.mxu0 %v1495
        %v1615 = vpop.f32.mrf.mxu0
        %v1616 = vadd.f32 0.0, %v1615
        %1617 = vmatmul.f32.gmra.mxu0 %v1496
        %v1618 = vpop.f32.mrf.mxu0
        %v1619 = vadd.f32 0.0, %v1618
        %1620 = vmatmul.f32.gmra.mxu0 %v1497
        %v1621 = vpop.f32.mrf.mxu0
        %v1622 = vadd.f32 0.0, %v1621
        %1623 = vmatmul.f32.gmra.mxu0 %v1498
        %v1624 = vpop.f32.mrf.mxu0
        %v1625 = vadd.f32 0.0, %v1624
        %1626 = vmatmul.f32.gmra.mxu0 %v1499
        %v1627 = vpop.f32.mrf.mxu0
        %v1628 = vadd.f32 0.0, %v1627
        %1629 = vdwg.mxu0
        %v1630 = vld [vmem:[%s2] sm:$0xf]
        %v1631 = vld [vmem:[%s3] sm:$0xf]
        %1633 = vset.pattern.permute.xlu0 0
        %1634 = vperm.xlu0 %1633, %v1631
        %v1635 = vpop.permute.xlu0 %1634
        %1637 = vmatpush.msra.mxu0 %v1563
        %1638 = vmatpush.msra.mxu0 %v1560
        %1639 = vmatpush.msra.mxu0 %v1557
        %1640 = vmatpush.msra.mxu0 %v1554
        %1641 = vmatpush.msra.mxu0 %v1551
        %1642 = vmatpush.msra.mxu0 %v1548
        %1643 = vmatpush.msra.mxu0 %v1545
        %1644 = vmatpush.msra.mxu0 %v1542
        %1645 = vmatpush.msra.mxu0 %v1539
        %1646 = vmatpush.msra.mxu0 %v1536
        %1647 = vmatpush.msra.mxu0 %v1533
        %1648 = vmatpush.msra.mxu0 %v1530
        %1649 = vmatpush.msra.mxu0 %v1527
        %1650 = vmatpush.msra.mxu0 %v1524
        %1651 = vmatpush.msra.mxu0 %v1521
        %1652 = vmatpush.msra.mxu0 %v1518
        %1653 = vmatmul.f32.gmra.mxu0 %v1630
        %v1654 = vpop.f32.mrf.mxu0
        %v1655 = vadd.f32 %v1635, %v1654
        %1656 = vdwg.mxu0
        %1657 = vmatpush.msra.mxu0 %v1628
        %1658 = vmatpush.msra.mxu0 %v1625
        %1659 = vmatpush.msra.mxu0 %v1622
        %1660 = vmatpush.msra.mxu0 %v1619
        %1661 = vmatpush.msra.mxu0 %v1616
        %1662 = vmatpush.msra.mxu0 %v1613
        %1663 = vmatpush.msra.mxu0 %v1610
        %1664 = vmatpush.msra.mxu0 %v1607
        %1665 = vmatpush.msra.mxu0 %v1604
        %1666 = vmatpush.msra.mxu0 %v1601
        %1667 = vmatpush.msra.mxu0 %v1598
        %1668 = vmatpush.msra.mxu0 %v1595
        %1669 = vmatpush.msra.mxu0 %v1592
        %1670 = vmatpush.msra.mxu0 %v1589
        %1671 = vmatpush.msra.mxu0 %v1586
        %1672 = vmatpush.msra.mxu0 %v1583
        %1673 = vmatmul.f32.gmra.mxu0 %v1630
        %v1674 = vpop.f32.mrf.mxu0
        %v1675 = vadd.f32 %v1635, %v1674
        %1676 = vdwg.mxu0
        %v1677 = vsel %vm475, %v1655, 0.0
        %v1678 = vsel %vm475, %v1675, 0.0
        %v1679 = vadd.f32 %v1677, %v1678
        %1680 = vadd.xlane.f32.xlu0 %v1679
        %v1681 = vpop.xlane.xlu0 %1680
        %v1682 = vrot.slane %v1681, 4
        %v1683 = vadd.f32 %v1681, %v1682
        %v1684 = vrot.slane %v1683, 2
        %v1685 = vadd.f32 %v1683, %v1684
        %v1686 = vrot.slane %v1685, 1
        %v1687 = vadd.f32 %v1685, %v1686
        %s1688 = vtos %v1687
        %v1689 = vstv %s1688
        %v1690 = vmul.f32 %v1689, 0.0009765625
        %v1691 = vmul.f32 %v1655, %v1655
        %v1692 = vmul.f32 %v1675, %v1675
        %v1693 = vsel %vm475, %v1691, 0.0
        %v1694 = vsel %vm475, %v1692, 0.0
        %v1695 = vadd.f32 %v1693, %v1694
        %1696 = vadd.xlane.f32.xlu0 %v1695
        %v1697 = vpop.xlane.xlu0 %1696
        %v1698 = vrot.slane %v1697, 4
        %v1699 = vadd.f32 %v1697, %v1698
        %v1700 = vrot.slane %v1699, 2
        %v1701 = vadd.f32 %v1699, %v1700
        %v1702 = vrot.slane %v1701, 1
        %v1703 = vadd.f32 %v1701, %v1702
        %s1704 = vtos %v1703
        %v1705 = vstv %s1704
        %v1706 = vmul.f32 %v1705, 0.0009765625
        %v1707 = vmul.f32 %v1690, %v1690
        %v1708 = vsub.f32 %v1706, %v1707
        %v1709 = vadd.f32 %v1708, 1e-05
        %v1710 = vrsqrt.pop %v1709
        %v1711 = vmul.f32 %v1710, %v1709
        %v1712 = vmul.f32 %v1711, %v1710
        %v1713 = vmul.f32 0.5, %v1712
        %v1714 = vsub.f32 1.5, %v1713
        %v1715 = vmul.f32 %v1710, %v1714
        %vm1716 = vweird.f32 %v1709
        %vm1717 = vweird.f32 %v1710
        %vm1718 = vmor %vm1716, %vm1717
        %v1719 = vsel %vm1718, %v1710, %v1715
        %v1720 = vsub.f32 %v1655, %v1690
        %v1721 = vsub.f32 %v1675, %v1690
        %v1722 = vmul.f32 %v1720, %v1719
        %v1723 = vmul.f32 %v1721, %v1719
        %v1724 = vld [vmem:[%s4] sm:$0xf]
        %1726 = vset.pattern.permute.xlu0 0
        %1727 = vperm.xlu0 %1726, %v1724
        %v1728 = vpop.permute.xlu0 %1727
        %v1730 = vmul.f32 %v1722, %v1728
        %v1731 = vmul.f32 %v1723, %v1728
        %v1732 = vld [vmem:[%s5] sm:$0xf]
        %1734 = vset.pattern.permute.xlu0 0
        %1735 = vperm.xlu0 %1734, %v1732
        %v1736 = vpop.permute.xlu0 %1735
        %v1738 = vadd.f32 %v1730, %v1736
        %v1739 = vadd.f32 %v1731, %v1736
        %v1742 = vrot.slane %v1739, 4
        %v1743 = vsel %vm475, %v1738, %v1742
        %1745 = vst [vmem:[%s271] sm:$0xff] %v1743
        %s1746 = sand.u32 %s181, 1
        %s1747 = scalar_lea.sflag [#allocation3], %s1746
        %s1748 = sand.u32 %s181, 1
        %s1749 = smul.addr %s1748, 8
        %s1750 = scalar_lea.vmem [#allocation2], %s1749
        // Predicated region
        $region49: #{tpu_custom_call.1} parent=47 // pred_check
          %p1751 = pneg %p191
        $region50: #{tpu_custom_call.1} parent=47 // pred_check_branch
          %1753 = sbr.rel (%p1751) target = $region52
        $region51: #{tpu_custom_call.1} parent=47 // pred_region
          %1755 = vsyncadd %s1747, 0
          %s1756 = smul.addr %s21, 2
          %s1757 = smul.addr %s1756, 4
          %s1758 = scalar_lea.hbm %s7, %s1757
          %s1760 = sshll.u32 %s1750, 4
          %s1761 = int_to_ptr.vmem [resolvable:$true] %s1760
          %s1762 = sshll.u32 %s1758, 4
          %s1763 = int_to_ptr.hbm [resolvable:$true] %s1762
          %1765 = dma.vmem_to_hbm [thread:$0]  %s1761, 128, %s1763, %s1747
        $region52: #{tpu_custom_call.1} parent=47 // pred_fallthru
          _
      $region48: #{tpu_custom_call.1} parent=5 // pred_fallthru
        _
      %p1766 = scmp.le.s32.totalorder 2, %s16
      // Predicated region
      $region53: #{tpu_custom_call.1} parent=5 // pred_check
        %p1767 = pneg %p1766
      $region54: #{tpu_custom_call.1} parent=5 // pred_check_branch
        %1769 = sbr.rel (%p1767) target = $region56
      $region55: #{tpu_custom_call.1} parent=5 // pred_region
        %s1770 = ssub.s32 %s16, 2
        // Predicated region
        $region57: #{tpu_custom_call.1} parent=55 // pred_check
          %p1771 = pneg %p197
        $region58: #{tpu_custom_call.1} parent=55 // pred_check_branch
          %1773 = sbr.rel (%p1771) target = $region60
        $region59: #{tpu_custom_call.1} parent=55 // pred_region
          %s1774 = sand.u32 %s182, 1
          %s1775 = scalar_lea.sflag [#allocation3], %s1774
          %s1776 = sand.u32 %s182, 1
          %s1777 = smul.addr %s1776, 8
          %s1778 = scalar_lea.vmem [#allocation2], %s1777
          %1780 = dma.done %s1775, 128
        $region60: #{tpu_custom_call.1} parent=55 // pred_fallthru
          _
      $region56: #{tpu_custom_call.1} parent=5 // pred_fallthru
        _
    $region6: #{tpu_custom_call.1} parent=1 // loop_footer
      %s20 = sadd.s32 1, %s16
    $region7: #{tpu_custom_call.1} parent=1 // loop_footer_branch
      %15 = sbr.rel target = $region3
    $region8: #{tpu_custom_call.1} parent=1 // loop_exit
      _
    %1781 = vsyncpa [#allocation3], 1
    %s1782 = scalar_lea.sflag [#allocation3], 1
    %1783 = vsyncpa %s1782, 1

</llo_original>
